<compile_context>
chip_gen: v7x
topology: tpu7x:2x2x1
jax: 0.10.0
libtpu: 0.0.40
codegen_flags: <defaults>
</compile_context>

<pallas_src>
import functools

import jax
import jax.numpy as jnp
import numpy as np
from jax import lax
from jax.experimental import pallas as pl
from jax.experimental.pallas import tpu as pltpu

# ---- small, module-consistent config -------------------------------------
VOCAB = 32     # vocab_size
EMBED = 16     # embed_size
HIDDEN = 32    # hidden_size
LAYERS = 2     # num_layers
BATCH = 2
SEQ = 8

B_PAD = 8      # pad batch (sublane axis) to the native 8 sublanes
OUT_PAD = 128  # pad fc output lanes to a full 128-lane vreg


# ---------------------------------------------------------------------------
# Fused kernel: (folded) embedding -> LSTM (num_layers, full sequence) -> fc.
# Everything lives in VMEM (whole-array default BlockSpecs, no grid).
# ---------------------------------------------------------------------------
def _char_rnn_fused_kernel(num_layers, T, Bp, H, V, ids_ref, *rest):
    # rest layout:
    #   [w_in(bf16), bias(f32), w_hh(bf16)] * num_layers, wfc, bfc, h0, c0   (inputs)
    #   logits_ref, hn_ref, cn_ref                                           (outputs)
    #   x_scr                                                                (VMEM scratch)
    layer_refs = rest[:3 * num_layers]
    wfc_ref, bfc_ref, h0_ref, c0_ref = rest[3 * num_layers:3 * num_layers + 4]
    logits_ref, hn_ref, cn_ref = rest[3 * num_layers + 4:3 * num_layers + 7]
    x_scr = rest[3 * num_layers + 7]                          # (T*Bp, H) f32 scratch

    # Embedding lookup fused with the layer-0 input projection: the table has
    # been folded into W0 = emb @ w_ih0^T (V x 4H, lane-dense) at prep time, so
    # one one-hot bf16 matmul produces ALL timesteps' layer-0 input gates.
    ids = ids_ref[...]                                        # (T*Bp, 1) int32, time-major
    iota = lax.broadcasted_iota(jnp.int32, (T * Bp, V), 1)
    onehot = jnp.where(ids == iota, 1.0, 0.0).astype(jnp.bfloat16)   # (T*Bp, V)

    h_finals, c_finals = [], []
    for l in range(num_layers):
        w_in = layer_refs[3 * l][...]        # bf16: (V,4H) for l==0 else (H,4H)
        bias = layer_refs[3 * l + 1][...]    # f32 (1,4H); g-gate columns pre-scaled x2
        whh = layer_refs[3 * l + 2][...]     # bf16 (H,4H); g-gate columns pre-scaled x2

        # Hoisted input projection: all T timesteps in one bf16 MXU matmul.
        if l == 0:
            lhs = onehot
        else:
            lhs = x_scr[...].astype(jnp.bfloat16)             # previous layer's outputs
        gin = jnp.dot(lhs, w_in, preferred_element_type=jnp.float32) + bias  # (T*Bp,4H) f32

        h = h0_ref[l]                        # (Bp, H) f32
        c = c0_ref[l]                        # (Bp, H) f32
        h_bf = h.astype(jnp.bfloat16)
        for t in range(T):                   # fully unrolled; ONE bf16 MXU op per step
            g = gin[t * Bp:(t + 1) * Bp, :] + jnp.dot(
                h_bf, whh, preferred_element_type=jnp.float32)   # (Bp,4H), order i,f,g,o
            s = jax.nn.sigmoid(g)            # single full-width (Bp,128) sigmoid
            i_g = s[:, 0:H]
            f_g = s[:, H:2 * H]
            g_g = 2.0 * s[:, 2 * H:3 * H] - 1.0   # tanh(x) = 2*sigmoid(2x) - 1 (pre-scaled cols)
            o_g = s[:, 3 * H:4 * H]
            c = f_g * c + i_g * g_g          # f32 elementwise (VPU)
            h = o_g * jnp.tanh(c)
            h_bf = h.astype(jnp.bfloat16)
            x_scr[pl.ds(t * Bp, Bp), :] = h  # aligned full-sublane-tile store
        h_finals.append(h)
        c_finals.append(c)
        # TODO(synk): optionally hold whh resident in the MXU across the unrolled
        # time loop via pltpu.matmul_push_rhs/matmul_acc_lhs/matmul_pop (same-RHS,
        # many dependent LHS); skipped to keep lowering portable across v5e/v6e/v7x.

    # fc: single lane-dense (T*Bp, 128) matmul + one unmasked full-block store.
    logits_ref[...] = (jnp.dot(x_scr[...].astype(jnp.bfloat16), wfc_ref[...],
                               preferred_element_type=jnp.float32) + bfc_ref[...])

    # Final states: one aligned store each (8-row blocks along the sublane axis).
    hn_ref[...] = jnp.concatenate(h_finals, axis=0)           # (L*Bp, H)
    cn_ref[...] = jnp.concatenate(c_finals, axis=0)


def _char_rnn_fused(ids_tm, layer_args, wfc, bfc, h0, c0, *, T, Bp, H, V):
    L = len(layer_args) // 3
    kernel = functools.partial(_char_rnn_fused_kernel, L, T, Bp, H, V)
    return pl.pallas_call(
        kernel,
        out_shape=[
            jax.ShapeDtypeStruct((T * Bp, OUT_PAD), jnp.float32),   # logits (lane-padded)
            jax.ShapeDtypeStruct((L * Bp, H), jnp.float32),         # h_n (flat)
            jax.ShapeDtypeStruct((L * Bp, H), jnp.float32),         # c_n (flat)
        ],
        scratch_shapes=[pltpu.VMEM((T * Bp, H), jnp.float32)],
        # Gridless: every operand is a whole-array VMEM block; single invocation,
        # single DMA in/out per tensor; nothing to pipeline at this size.
    )(ids_tm, *layer_args, wfc, bfc, h0, c0)


# ---------------------------------------------------------------------------
# One-time (cacheable) parameter preparation: transposes, b_ih+b_hh fusion,
# x2 g-column scaling (tanh->sigmoid fold), embedding fold into layer-0
# weights, fc lane padding, bf16 casts of all MXU operands.
# ---------------------------------------------------------------------------
def prepare_params(params):
    H = HIDDEN
    layer_args = []
    for l, layer in enumerate(params["layers"]):
        wih_t = layer["w_ih"].T.astype(jnp.float32)           # (E_in, 4H)
        whh_t = layer["w_hh"].T.astype(jnp.float32)           # (H,    4H)
        bias = (layer["b_ih"] + layer["b_hh"]).astype(jnp.float32)   # (4H,)
        if l == 0:
            # Fold the embedding table into the layer-0 input weight: (V, 4H).
            wih_t = params["embedding"].astype(jnp.float32) @ wih_t
        # Pre-scale g-gate columns by 2 so the kernel can compute
        # tanh(x) = 2*sigmoid(2x) - 1 from its full-width sigmoid.
        wih_t = wih_t.at[:, 2 * H:3 * H].multiply(2.0)
        whh_t = whh_t.at[:, 2 * H:3 * H].multiply(2.0)
        bias = bias.at[2 * H:3 * H].multiply(2.0)
        layer_args += [wih_t.astype(jnp.bfloat16),
                       bias.reshape(1, 4 * H),
                       whh_t.astype(jnp.bfloat16)]
    wfc = jnp.zeros((H, OUT_PAD), jnp.float32).at[:, :VOCAB].set(
        params["fc_w"].T.astype(jnp.float32))
    bfc = jnp.zeros((1, OUT_PAD), jnp.float32).at[0, :VOCAB].set(
        params["fc_b"].astype(jnp.float32))
    return {"layer_args": layer_args, "wfc": wfc.astype(jnp.bfloat16), "bfc": bfc}


# ---------------------------------------------------------------------------
# CharRNN forward (embedding -> multi-layer LSTM -> fc), PyTorch semantics.
# Takes the prepared (cached) params; only tiny per-call glue remains here.
# ---------------------------------------------------------------------------
def char_rnn_forward(prepped, x_ids, h=None):
    B, T = x_ids.shape
    L = LAYERS

    # time-major ids, batch padded to 8 sublanes (rows b>=B are dummies).
    ids_tm = (jnp.zeros((T, B_PAD), jnp.int32)
              .at[:, :B].set(jnp.transpose(x_ids, (1, 0)).astype(jnp.int32))
              .reshape(T * B_PAD, 1))

    if h is None:
        h0 = jnp.zeros((L, B_PAD, HIDDEN), jnp.float32)
        c0 = jnp.zeros((L, B_PAD, HIDDEN), jnp.float32)
    else:
        h0_in, c0_in = h
        h0 = jnp.zeros((L, B_PAD, HIDDEN), jnp.float32).at[:, :B].set(h0_in)
        c0 = jnp.zeros((L, B_PAD, HIDDEN), jnp.float32).at[:, :B].set(c0_in)

    logits_flat, hn_flat, cn_flat = _char_rnn_fused(
        ids_tm, prepped["layer_args"], prepped["wfc"], prepped["bfc"],
        h0, c0, T=T, Bp=B_PAD, H=HIDDEN, V=VOCAB)

    logits = (logits_flat[:, :VOCAB]
              .reshape(T, B_PAD, VOCAB)[:, :B]
              .transpose(1, 0, 2))                            # (B, T, vocab)
    h_n = hn_flat.reshape(L, B_PAD, HIDDEN)[:, :B]            # (L, B, H)
    c_n = cn_flat.reshape(L, B_PAD, HIDDEN)[:, :B]
    return logits, (h_n, c_n)


# ---------------------------------------------------------------------------
# Deterministic parameter init (PyTorch-style uniform(-1/sqrt(H), 1/sqrt(H))).
# ---------------------------------------------------------------------------
def init_params(key):
    k = 1.0 / np.sqrt(HIDDEN)
    keys = jax.random.split(key, 3 + 4 * LAYERS)
    params = {"embedding": jax.random.normal(keys[0], (VOCAB, EMBED), jnp.float32)}
    layers = []
    in_size = EMBED
    ki = 1
    for _ in range(LAYERS):
        layers.append({
            "w_ih": jax.random.uniform(keys[ki + 0], (4 * HIDDEN, in_size), jnp.float32, -k, k),
            "w_hh": jax.random.uniform(keys[ki + 1], (4 * HIDDEN, HIDDEN), jnp.float32, -k, k),
            "b_ih": jax.random.uniform(keys[ki + 2], (4 * HIDDEN,), jnp.float32, -k, k),
            "b_hh": jax.random.uniform(keys[ki + 3], (4 * HIDDEN,), jnp.float32, -k, k),
        })
        ki += 4
        in_size = HIDDEN
    params["layers"] = layers
    params["fc_w"] = jax.random.uniform(keys[ki + 0], (VOCAB, HIDDEN), jnp.float32, -k, k)
    params["fc_b"] = jax.random.uniform(keys[ki + 1], (VOCAB,), jnp.float32, -k, k)
    return params


# ---------------------------------------------------------------------------
# Pure-JAX f32 reference of the same LSTM math (for correctness check).
# ---------------------------------------------------------------------------
def ref_forward(params, x_ids):
    emb = jnp.take(params["embedding"], x_ids, axis=0).astype(jnp.float32)
    B, T, _ = emb.shape
    x = emb
    h_n, c_n = [], []
    for layer in params["layers"]:
        h = jnp.zeros((B, HIDDEN), jnp.float32)
        c = jnp.zeros((B, HIDDEN), jnp.float32)
        ys = []
        for t in range(T):
            gates = (x[:, t] @ layer["w_ih"].T + layer["b_ih"]
                     + h @ layer["w_hh"].T + layer["b_hh"])
            i = jax.nn.sigmoid(gates[:, :HIDDEN])
            f = jax.nn.sigmoid(gates[:, HIDDEN:2 * HIDDEN])
            g = jnp.tanh(gates[:, 2 * HIDDEN:3 * HIDDEN])
            o = jax.nn.sigmoid(gates[:, 3 * HIDDEN:])
            c = f * c + i * g
            h = o * jnp.tanh(c)
            ys.append(h)
        x = jnp.stack(ys, axis=1)
        h_n.append(h)
        c_n.append(c)
    out = x @ params["fc_w"].T + params["fc_b"]
    return out, (jnp.stack(h_n), jnp.stack(c_n))


if __name__ == "__main__":
    key = jax.random.PRNGKey(0)
    pkey, xkey = jax.random.split(key)
    params = init_params(pkey)
    prepped = prepare_params(params)          # one-time cached prep, not per-forward
    x_ids = jax.random.randint(xkey, (BATCH, SEQ), 0, VOCAB, dtype=jnp.int32)

    out, (h_n, c_n) = jax.block_until_ready(char_rnn_forward(prepped, x_ids, h=None))

    # correctness check against pure-f32 JAX reference (bf16 MXU operands ->
    # loosened tolerance, per review guidance)
    ref_out, (ref_h, ref_c) = ref_forward(params, x_ids)
    assert out.shape == (BATCH, SEQ, VOCAB)
    assert h_n.shape == (LAYERS, BATCH, HIDDEN) and c_n.shape == (LAYERS, BATCH, HIDDEN)
    np.testing.assert_allclose(np.asarray(out), np.asarray(ref_out), atol=5e-2, rtol=5e-2)
    np.testing.assert_allclose(np.asarray(h_n), np.asarray(ref_h), atol=5e-2, rtol=5e-2)
    np.testing.assert_allclose(np.asarray(c_n), np.asarray(ref_c), atol=5e-2, rtol=5e-2)

    print("KERNEL_OK")
</pallas_src>

<mosaic_0001>
module attributes {stable_mosaic.version = 11 : i64} {
  func.func @_char_rnn_fused_kernel(%arg0: memref<64x1xi32, #tpu.memory_space<vmem>>, %arg1: memref<32x128xbf16, #tpu.memory_space<vmem>>, %arg2: memref<1x128xf32, #tpu.memory_space<vmem>>, %arg3: memref<32x128xbf16, #tpu.memory_space<vmem>>, %arg4: memref<32x128xbf16, #tpu.memory_space<vmem>>, %arg5: memref<1x128xf32, #tpu.memory_space<vmem>>, %arg6: memref<32x128xbf16, #tpu.memory_space<vmem>>, %arg7: memref<32x128xbf16, #tpu.memory_space<vmem>>, %arg8: memref<1x128xf32, #tpu.memory_space<vmem>>, %arg9: memref<2x8x32xf32, #tpu.memory_space<vmem>>, %arg10: memref<2x8x32xf32, #tpu.memory_space<vmem>>, %arg11: memref<64x128xf32, #tpu.memory_space<vmem>>, %arg12: memref<16x32xf32, #tpu.memory_space<vmem>>, %arg13: memref<16x32xf32, #tpu.memory_space<vmem>>, %arg14: memref<64x32xf32, #tpu.memory_space<vmem>>) attributes {dimension_semantics = [], scalar_prefetch = 0 : i64, scratch_operands = 1 : i64, tpu.core_type = #tpu.core_type<tc>} {
    %c0 = arith.constant 0 : index
    %c0_0 = arith.constant 0 : index
    %0 = vector.load %arg0[%c0, %c0_0] : memref<64x1xi32, #tpu.memory_space<vmem>>, vector<64x1xi32>
    %1 = tpu.iota {dimensions = array<i32: 1>} : vector<64x32xi32>
    %2 = vector.broadcast %0 : vector<64x1xi32> to vector<64x32xi32>
    %3 = arith.cmpi eq, %2, %1 : vector<64x32xi32>
    %cst = arith.constant 1.000000e+00 : f32
    %cst_1 = arith.constant 0.000000e+00 : f32
    %4 = vector.broadcast %cst : f32 to vector<64x32xf32>
    %5 = vector.broadcast %cst_1 : f32 to vector<64x32xf32>
    %6 = arith.select %3, %4, %5 : vector<64x32xi1>, vector<64x32xf32>
    %7 = arith.truncf %6 : vector<64x32xf32> to vector<64x32xbf16>
    %c0_2 = arith.constant 0 : index
    %c0_3 = arith.constant 0 : index
    %8 = vector.load %arg1[%c0_2, %c0_3] : memref<32x128xbf16, #tpu.memory_space<vmem>>, vector<32x128xbf16>
    %c0_4 = arith.constant 0 : index
    %c0_5 = arith.constant 0 : index
    %9 = vector.load %arg2[%c0_4, %c0_5] : memref<1x128xf32, #tpu.memory_space<vmem>>, vector<1x128xf32>
    %c0_6 = arith.constant 0 : index
    %c0_7 = arith.constant 0 : index
    %10 = vector.load %arg3[%c0_6, %c0_7] : memref<32x128xbf16, #tpu.memory_space<vmem>>, vector<32x128xbf16>
    %cst_8 = arith.constant dense<0.000000e+00> : vector<64x128xf32>
    %11 = tpu.matmul %7, %8, %cst_8 {dimension_numbers = #tpu.dot_dimension_numbers<[1], [0], [0], [1], [0, 0, 1, 1], [], []>} : vector<64x32xbf16>, vector<32x128xbf16>, vector<64x128xf32> -> vector<64x128xf32>
    %12 = vector.broadcast %9 : vector<1x128xf32> to vector<64x128xf32>
    %13 = arith.addf %11, %12 : vector<64x128xf32>
    %c0_9 = arith.constant 0 : index
    %c0_10 = arith.constant 0 : index
    %c0_11 = arith.constant 0 : index
    %14 = vector.load %arg9[%c0_9, %c0_10, %c0_11] : memref<2x8x32xf32, #tpu.memory_space<vmem>>, vector<1x8x32xf32>
    %15 = vector.shape_cast %14 : vector<1x8x32xf32> to vector<8x32xf32>
    %c0_12 = arith.constant 0 : index
    %c0_13 = arith.constant 0 : index
    %c0_14 = arith.constant 0 : index
    %16 = vector.load %arg10[%c0_12, %c0_13, %c0_14] : memref<2x8x32xf32, #tpu.memory_space<vmem>>, vector<1x8x32xf32>
    %17 = vector.shape_cast %16 : vector<1x8x32xf32> to vector<8x32xf32>
    %18 = arith.truncf %15 : vector<8x32xf32> to vector<8x32xbf16>
    %19 = vector.extract_strided_slice %13 {offsets = [0, 0], sizes = [8, 128], strides = [1, 1]} : vector<64x128xf32> to vector<8x128xf32>
    %cst_15 = arith.constant dense<0.000000e+00> : vector<8x128xf32>
    %20 = tpu.matmul %18, %10, %cst_15 {dimension_numbers = #tpu.dot_dimension_numbers<[1], [0], [0], [1], [0, 0, 1, 1], [], []>} : vector<8x32xbf16>, vector<32x128xbf16>, vector<8x128xf32> -> vector<8x128xf32>
    %21 = arith.addf %19, %20 : vector<8x128xf32>
    %22 = arith.negf %21 : vector<8x128xf32>
    %23 = math.exp %22 : vector<8x128xf32>
    %cst_16 = arith.constant 1.000000e+00 : f32
    %24 = vector.broadcast %cst_16 : f32 to vector<8x128xf32>
    %25 = arith.addf %24, %23 : vector<8x128xf32>
    %26 = arith.divf %24, %25 : vector<8x128xf32>
    %27 = vector.extract_strided_slice %26 {offsets = [0, 0], sizes = [8, 32], strides = [1, 1]} : vector<8x128xf32> to vector<8x32xf32>
    %28 = vector.extract_strided_slice %26 {offsets = [0, 32], sizes = [8, 32], strides = [1, 1]} : vector<8x128xf32> to vector<8x32xf32>
    %29 = vector.extract_strided_slice %26 {offsets = [0, 64], sizes = [8, 32], strides = [1, 1]} : vector<8x128xf32> to vector<8x32xf32>
    %cst_17 = arith.constant 2.000000e+00 : f32
    %30 = vector.broadcast %cst_17 : f32 to vector<8x32xf32>
    %31 = arith.mulf %30, %29 : vector<8x32xf32>
    %cst_18 = arith.constant 1.000000e+00 : f32
    %32 = vector.broadcast %cst_18 : f32 to vector<8x32xf32>
    %33 = arith.subf %31, %32 : vector<8x32xf32>
    %34 = vector.extract_strided_slice %26 {offsets = [0, 96], sizes = [8, 32], strides = [1, 1]} : vector<8x128xf32> to vector<8x32xf32>
    %35 = arith.mulf %28, %17 : vector<8x32xf32>
    %36 = arith.mulf %27, %33 : vector<8x32xf32>
    %37 = arith.addf %35, %36 : vector<8x32xf32>
    %38 = math.tanh %37 : vector<8x32xf32>
    %39 = arith.mulf %34, %38 : vector<8x32xf32>
    %40 = arith.truncf %39 : vector<8x32xf32> to vector<8x32xbf16>
    %c0_19 = arith.constant 0 : index
    %c0_20 = arith.constant 0 : index
    %41 = vector.load %arg14[%c0_19, %c0_20] : memref<64x32xf32, #tpu.memory_space<vmem>>, vector<8x32xf32>
    tpu.vector_store %arg14[%c0_19, %c0_20], %39 {strides = array<i32>} : memref<64x32xf32, #tpu.memory_space<vmem>>, vector<8x32xf32>,
    %42 = vector.extract_strided_slice %13 {offsets = [8, 0], sizes = [8, 128], strides = [1, 1]} : vector<64x128xf32> to vector<8x128xf32>
    %cst_21 = arith.constant dense<0.000000e+00> : vector<8x128xf32>
    %43 = tpu.matmul %40, %10, %cst_21 {dimension_numbers = #tpu.dot_dimension_numbers<[1], [0], [0], [1], [0, 0, 1, 1], [], []>} : vector<8x32xbf16>, vector<32x128xbf16>, vector<8x128xf32> -> vector<8x128xf32>
    %44 = arith.addf %42, %43 : vector<8x128xf32>
    %45 = arith.negf %44 : vector<8x128xf32>
    %46 = math.exp %45 : vector<8x128xf32>
    %cst_22 = arith.constant 1.000000e+00 : f32
    %47 = vector.broadcast %cst_22 : f32 to vector<8x128xf32>
    %48 = arith.addf %47, %46 : vector<8x128xf32>
    %49 = arith.divf %47, %48 : vector<8x128xf32>
    %50 = vector.extract_strided_slice %49 {offsets = [0, 0], sizes = [8, 32], strides = [1, 1]} : vector<8x128xf32> to vector<8x32xf32>
    %51 = vector.extract_strided_slice %49 {offsets = [0, 32], sizes = [8, 32], strides = [1, 1]} : vector<8x128xf32> to vector<8x32xf32>
    %52 = vector.extract_strided_slice %49 {offsets = [0, 64], sizes = [8, 32], strides = [1, 1]} : vector<8x128xf32> to vector<8x32xf32>
    %cst_23 = arith.constant 2.000000e+00 : f32
    %53 = vector.broadcast %cst_23 : f32 to vector<8x32xf32>
    %54 = arith.mulf %53, %52 : vector<8x32xf32>
    %cst_24 = arith.constant 1.000000e+00 : f32
    %55 = vector.broadcast %cst_24 : f32 to vector<8x32xf32>
    %56 = arith.subf %54, %55 : vector<8x32xf32>
    %57 = vector.extract_strided_slice %49 {offsets = [0, 96], sizes = [8, 32], strides = [1, 1]} : vector<8x128xf32> to vector<8x32xf32>
    %58 = arith.mulf %51, %37 : vector<8x32xf32>
    %59 = arith.mulf %50, %56 : vector<8x32xf32>
    %60 = arith.addf %58, %59 : vector<8x32xf32>
    %61 = math.tanh %60 : vector<8x32xf32>
    %62 = arith.mulf %57, %61 : vector<8x32xf32>
    %63 = arith.truncf %62 : vector<8x32xf32> to vector<8x32xbf16>
    %c8 = arith.constant 8 : index
    %c0_25 = arith.constant 0 : index
    %64 = vector.load %arg14[%c8, %c0_25] : memref<64x32xf32, #tpu.memory_space<vmem>>, vector<8x32xf32>
    tpu.vector_store %arg14[%c8, %c0_25], %62 {strides = array<i32>} : memref<64x32xf32, #tpu.memory_space<vmem>>, vector<8x32xf32>,
    %65 = vector.extract_strided_slice %13 {offsets = [16, 0], sizes = [8, 128], strides = [1, 1]} : vector<64x128xf32> to vector<8x128xf32>
    %cst_26 = arith.constant dense<0.000000e+00> : vector<8x128xf32>
    %66 = tpu.matmul %63, %10, %cst_26 {dimension_numbers = #tpu.dot_dimension_numbers<[1], [0], [0], [1], [0, 0, 1, 1], [], []>} : vector<8x32xbf16>, vector<32x128xbf16>, vector<8x128xf32> -> vector<8x128xf32>
    %67 = arith.addf %65, %66 : vector<8x128xf32>
    %68 = arith.negf %67 : vector<8x128xf32>
    %69 = math.exp %68 : vector<8x128xf32>
    %cst_27 = arith.constant 1.000000e+00 : f32
    %70 = vector.broadcast %cst_27 : f32 to vector<8x128xf32>
    %71 = arith.addf %70, %69 : vector<8x128xf32>
    %72 = arith.divf %70, %71 : vector<8x128xf32>
    %73 = vector.extract_strided_slice %72 {offsets = [0, 0], sizes = [8, 32], strides = [1, 1]} : vector<8x128xf32> to vector<8x32xf32>
    %74 = vector.extract_strided_slice %72 {offsets = [0, 32], sizes = [8, 32], strides = [1, 1]} : vector<8x128xf32> to vector<8x32xf32>
    %75 = vector.extract_strided_slice %72 {offsets = [0, 64], sizes = [8, 32], strides = [1, 1]} : vector<8x128xf32> to vector<8x32xf32>
    %cst_28 = arith.constant 2.000000e+00 : f32
    %76 = vector.broadcast %cst_28 : f32 to vector<8x32xf32>
    %77 = arith.mulf %76, %75 : vector<8x32xf32>
    %cst_29 = arith.constant 1.000000e+00 : f32
    %78 = vector.broadcast %cst_29 : f32 to vector<8x32xf32>
    %79 = arith.subf %77, %78 : vector<8x32xf32>
    %80 = vector.extract_strided_slice %72 {offsets = [0, 96], sizes = [8, 32], strides = [1, 1]} : vector<8x128xf32> to vector<8x32xf32>
    %81 = arith.mulf %74, %60 : vector<8x32xf32>
    %82 = arith.mulf %73, %79 : vector<8x32xf32>
    %83 = arith.addf %81, %82 : vector<8x32xf32>
    %84 = math.tanh %83 : vector<8x32xf32>
    %85 = arith.mulf %80, %84 : vector<8x32xf32>
    %86 = arith.truncf %85 : vector<8x32xf32> to vector<8x32xbf16>
    %c16 = arith.constant 16 : index
    %c0_30 = arith.constant 0 : index
    %87 = vector.load %arg14[%c16, %c0_30] : memref<64x32xf32, #tpu.memory_space<vmem>>, vector<8x32xf32>
    tpu.vector_store %arg14[%c16, %c0_30], %85 {strides = array<i32>} : memref<64x32xf32, #tpu.memory_space<vmem>>, vector<8x32xf32>,
    %88 = vector.extract_strided_slice %13 {offsets = [24, 0], sizes = [8, 128], strides = [1, 1]} : vector<64x128xf32> to vector<8x128xf32>
    %cst_31 = arith.constant dense<0.000000e+00> : vector<8x128xf32>
    %89 = tpu.matmul %86, %10, %cst_31 {dimension_numbers = #tpu.dot_dimension_numbers<[1], [0], [0], [1], [0, 0, 1, 1], [], []>} : vector<8x32xbf16>, vector<32x128xbf16>, vector<8x128xf32> -> vector<8x128xf32>
    %90 = arith.addf %88, %89 : vector<8x128xf32>
    %91 = arith.negf %90 : vector<8x128xf32>
    %92 = math.exp %91 : vector<8x128xf32>
    %cst_32 = arith.constant 1.000000e+00 : f32
    %93 = vector.broadcast %cst_32 : f32 to vector<8x128xf32>
    %94 = arith.addf %93, %92 : vector<8x128xf32>
    %95 = arith.divf %93, %94 : vector<8x128xf32>
    %96 = vector.extract_strided_slice %95 {offsets = [0, 0], sizes = [8, 32], strides = [1, 1]} : vector<8x128xf32> to vector<8x32xf32>
    %97 = vector.extract_strided_slice %95 {offsets = [0, 32], sizes = [8, 32], strides = [1, 1]} : vector<8x128xf32> to vector<8x32xf32>
    %98 = vector.extract_strided_slice %95 {offsets = [0, 64], sizes = [8, 32], strides = [1, 1]} : vector<8x128xf32> to vector<8x32xf32>
    %cst_33 = arith.constant 2.000000e+00 : f32
    %99 = vector.broadcast %cst_33 : f32 to vector<8x32xf32>
    %100 = arith.mulf %99, %98 : vector<8x32xf32>
    %cst_34 = arith.constant 1.000000e+00 : f32
    %101 = vector.broadcast %cst_34 : f32 to vector<8x32xf32>
    %102 = arith.subf %100, %101 : vector<8x32xf32>
    %103 = vector.extract_strided_slice %95 {offsets = [0, 96], sizes = [8, 32], strides = [1, 1]} : vector<8x128xf32> to vector<8x32xf32>
    %104 = arith.mulf %97, %83 : vector<8x32xf32>
    %105 = arith.mulf %96, %102 : vector<8x32xf32>
    %106 = arith.addf %104, %105 : vector<8x32xf32>
    %107 = math.tanh %106 : vector<8x32xf32>
    %108 = arith.mulf %103, %107 : vector<8x32xf32>
    %109 = arith.truncf %108 : vector<8x32xf32> to vector<8x32xbf16>
    %c24 = arith.constant 24 : index
    %c0_35 = arith.constant 0 : index
    %110 = vector.load %arg14[%c24, %c0_35] : memref<64x32xf32, #tpu.memory_space<vmem>>, vector<8x32xf32>
    tpu.vector_store %arg14[%c24, %c0_35], %108 {strides = array<i32>} : memref<64x32xf32, #tpu.memory_space<vmem>>, vector<8x32xf32>,
    %111 = vector.extract_strided_slice %13 {offsets = [32, 0], sizes = [8, 128], strides = [1, 1]} : vector<64x128xf32> to vector<8x128xf32>
    %cst_36 = arith.constant dense<0.000000e+00> : vector<8x128xf32>
    %112 = tpu.matmul %109, %10, %cst_36 {dimension_numbers = #tpu.dot_dimension_numbers<[1], [0], [0], [1], [0, 0, 1, 1], [], []>} : vector<8x32xbf16>, vector<32x128xbf16>, vector<8x128xf32> -> vector<8x128xf32>
    %113 = arith.addf %111, %112 : vector<8x128xf32>
    %114 = arith.negf %113 : vector<8x128xf32>
    %115 = math.exp %114 : vector<8x128xf32>
    %cst_37 = arith.constant 1.000000e+00 : f32
    %116 = vector.broadcast %cst_37 : f32 to vector<8x128xf32>
    %117 = arith.addf %116, %115 : vector<8x128xf32>
    %118 = arith.divf %116, %117 : vector<8x128xf32>
    %119 = vector.extract_strided_slice %118 {offsets = [0, 0], sizes = [8, 32], strides = [1, 1]} : vector<8x128xf32> to vector<8x32xf32>
    %120 = vector.extract_strided_slice %118 {offsets = [0, 32], sizes = [8, 32], strides = [1, 1]} : vector<8x128xf32> to vector<8x32xf32>
    %121 = vector.extract_strided_slice %118 {offsets = [0, 64], sizes = [8, 32], strides = [1, 1]} : vector<8x128xf32> to vector<8x32xf32>
    %cst_38 = arith.constant 2.000000e+00 : f32
    %122 = vector.broadcast %cst_38 : f32 to vector<8x32xf32>
    %123 = arith.mulf %122, %121 : vector<8x32xf32>
    %cst_39 = arith.constant 1.000000e+00 : f32
    %124 = vector.broadcast %cst_39 : f32 to vector<8x32xf32>
    %125 = arith.subf %123, %124 : vector<8x32xf32>
    %126 = vector.extract_strided_slice %118 {offsets = [0, 96], sizes = [8, 32], strides = [1, 1]} : vector<8x128xf32> to vector<8x32xf32>
    %127 = arith.mulf %120, %106 : vector<8x32xf32>
    %128 = arith.mulf %119, %125 : vector<8x32xf32>
    %129 = arith.addf %127, %128 : vector<8x32xf32>
    %130 = math.tanh %129 : vector<8x32xf32>
    %131 = arith.mulf %126, %130 : vector<8x32xf32>
    %132 = arith.truncf %131 : vector<8x32xf32> to vector<8x32xbf16>
    %c32 = arith.constant 32 : index
    %c0_40 = arith.constant 0 : index
    %133 = vector.load %arg14[%c32, %c0_40] : memref<64x32xf32, #tpu.memory_space<vmem>>, vector<8x32xf32>
    tpu.vector_store %arg14[%c32, %c0_40], %131 {strides = array<i32>} : memref<64x32xf32, #tpu.memory_space<vmem>>, vector<8x32xf32>,
    %134 = vector.extract_strided_slice %13 {offsets = [40, 0], sizes = [8, 128], strides = [1, 1]} : vector<64x128xf32> to vector<8x128xf32>
    %cst_41 = arith.constant dense<0.000000e+00> : vector<8x128xf32>
    %135 = tpu.matmul %132, %10, %cst_41 {dimension_numbers = #tpu.dot_dimension_numbers<[1], [0], [0], [1], [0, 0, 1, 1], [], []>} : vector<8x32xbf16>, vector<32x128xbf16>, vector<8x128xf32> -> vector<8x128xf32>
    %136 = arith.addf %134, %135 : vector<8x128xf32>
    %137 = arith.negf %136 : vector<8x128xf32>
    %138 = math.exp %137 : vector<8x128xf32>
    %cst_42 = arith.constant 1.000000e+00 : f32
    %139 = vector.broadcast %cst_42 : f32 to vector<8x128xf32>
    %140 = arith.addf %139, %138 : vector<8x128xf32>
    %141 = arith.divf %139, %140 : vector<8x128xf32>
    %142 = vector.extract_strided_slice %141 {offsets = [0, 0], sizes = [8, 32], strides = [1, 1]} : vector<8x128xf32> to vector<8x32xf32>
    %143 = vector.extract_strided_slice %141 {offsets = [0, 32], sizes = [8, 32], strides = [1, 1]} : vector<8x128xf32> to vector<8x32xf32>
    %144 = vector.extract_strided_slice %141 {offsets = [0, 64], sizes = [8, 32], strides = [1, 1]} : vector<8x128xf32> to vector<8x32xf32>
    %cst_43 = arith.constant 2.000000e+00 : f32
    %145 = vector.broadcast %cst_43 : f32 to vector<8x32xf32>
    %146 = arith.mulf %145, %144 : vector<8x32xf32>
    %cst_44 = arith.constant 1.000000e+00 : f32
    %147 = vector.broadcast %cst_44 : f32 to vector<8x32xf32>
    %148 = arith.subf %146, %147 : vector<8x32xf32>
    %149 = vector.extract_strided_slice %141 {offsets = [0, 96], sizes = [8, 32], strides = [1, 1]} : vector<8x128xf32> to vector<8x32xf32>
    %150 = arith.mulf %143, %129 : vector<8x32xf32>
    %151 = arith.mulf %142, %148 : vector<8x32xf32>
    %152 = arith.addf %150, %151 : vector<8x32xf32>
    %153 = math.tanh %152 : vector<8x32xf32>
    %154 = arith.mulf %149, %153 : vector<8x32xf32>
    %155 = arith.truncf %154 : vector<8x32xf32> to vector<8x32xbf16>
    %c40 = arith.constant 40 : index
    %c0_45 = arith.constant 0 : index
    %156 = vector.load %arg14[%c40, %c0_45] : memref<64x32xf32, #tpu.memory_space<vmem>>, vector<8x32xf32>
    tpu.vector_store %arg14[%c40, %c0_45], %154 {strides = array<i32>} : memref<64x32xf32, #tpu.memory_space<vmem>>, vector<8x32xf32>,
    %157 = vector.extract_strided_slice %13 {offsets = [48, 0], sizes = [8, 128], strides = [1, 1]} : vector<64x128xf32> to vector<8x128xf32>
    %cst_46 = arith.constant dense<0.000000e+00> : vector<8x128xf32>
    %158 = tpu.matmul %155, %10, %cst_46 {dimension_numbers = #tpu.dot_dimension_numbers<[1], [0], [0], [1], [0, 0, 1, 1], [], []>} : vector<8x32xbf16>, vector<32x128xbf16>, vector<8x128xf32> -> vector<8x128xf32>
    %159 = arith.addf %157, %158 : vector<8x128xf32>
    %160 = arith.negf %159 : vector<8x128xf32>
    %161 = math.exp %160 : vector<8x128xf32>
    %cst_47 = arith.constant 1.000000e+00 : f32
    %162 = vector.broadcast %cst_47 : f32 to vector<8x128xf32>
    %163 = arith.addf %162, %161 : vector<8x128xf32>
    %164 = arith.divf %162, %163 : vector<8x128xf32>
    %165 = vector.extract_strided_slice %164 {offsets = [0, 0], sizes = [8, 32], strides = [1, 1]} : vector<8x128xf32> to vector<8x32xf32>
    %166 = vector.extract_strided_slice %164 {offsets = [0, 32], sizes = [8, 32], strides = [1, 1]} : vector<8x128xf32> to vector<8x32xf32>
    %167 = vector.extract_strided_slice %164 {offsets = [0, 64], sizes = [8, 32], strides = [1, 1]} : vector<8x128xf32> to vector<8x32xf32>
    %cst_48 = arith.constant 2.000000e+00 : f32
    %168 = vector.broadcast %cst_48 : f32 to vector<8x32xf32>
    %169 = arith.mulf %168, %167 : vector<8x32xf32>
    %cst_49 = arith.constant 1.000000e+00 : f32
    %170 = vector.broadcast %cst_49 : f32 to vector<8x32xf32>
    %171 = arith.subf %169, %170 : vector<8x32xf32>
    %172 = vector.extract_strided_slice %164 {offsets = [0, 96], sizes = [8, 32], strides = [1, 1]} : vector<8x128xf32> to vector<8x32xf32>
    %173 = arith.mulf %166, %152 : vector<8x32xf32>
    %174 = arith.mulf %165, %171 : vector<8x32xf32>
    %175 = arith.addf %173, %174 : vector<8x32xf32>
    %176 = math.tanh %175 : vector<8x32xf32>
    %177 = arith.mulf %172, %176 : vector<8x32xf32>
    %178 = arith.truncf %177 : vector<8x32xf32> to vector<8x32xbf16>
    %c48 = arith.constant 48 : index
    %c0_50 = arith.constant 0 : index
    %179 = vector.load %arg14[%c48, %c0_50] : memref<64x32xf32, #tpu.memory_space<vmem>>, vector<8x32xf32>
    tpu.vector_store %arg14[%c48, %c0_50], %177 {strides = array<i32>} : memref<64x32xf32, #tpu.memory_space<vmem>>, vector<8x32xf32>,
    %180 = vector.extract_strided_slice %13 {offsets = [56, 0], sizes = [8, 128], strides = [1, 1]} : vector<64x128xf32> to vector<8x128xf32>
    %cst_51 = arith.constant dense<0.000000e+00> : vector<8x128xf32>
    %181 = tpu.matmul %178, %10, %cst_51 {dimension_numbers = #tpu.dot_dimension_numbers<[1], [0], [0], [1], [0, 0, 1, 1], [], []>} : vector<8x32xbf16>, vector<32x128xbf16>, vector<8x128xf32> -> vector<8x128xf32>
    %182 = arith.addf %180, %181 : vector<8x128xf32>
    %183 = arith.negf %182 : vector<8x128xf32>
    %184 = math.exp %183 : vector<8x128xf32>
    %cst_52 = arith.constant 1.000000e+00 : f32
    %185 = vector.broadcast %cst_52 : f32 to vector<8x128xf32>
    %186 = arith.addf %185, %184 : vector<8x128xf32>
    %187 = arith.divf %185, %186 : vector<8x128xf32>
    %188 = vector.extract_strided_slice %187 {offsets = [0, 0], sizes = [8, 32], strides = [1, 1]} : vector<8x128xf32> to vector<8x32xf32>
    %189 = vector.extract_strided_slice %187 {offsets = [0, 32], sizes = [8, 32], strides = [1, 1]} : vector<8x128xf32> to vector<8x32xf32>
    %190 = vector.extract_strided_slice %187 {offsets = [0, 64], sizes = [8, 32], strides = [1, 1]} : vector<8x128xf32> to vector<8x32xf32>
    %cst_53 = arith.constant 2.000000e+00 : f32
    %191 = vector.broadcast %cst_53 : f32 to vector<8x32xf32>
    %192 = arith.mulf %191, %190 : vector<8x32xf32>
    %cst_54 = arith.constant 1.000000e+00 : f32
    %193 = vector.broadcast %cst_54 : f32 to vector<8x32xf32>
    %194 = arith.subf %192, %193 : vector<8x32xf32>
    %195 = vector.extract_strided_slice %187 {offsets = [0, 96], sizes = [8, 32], strides = [1, 1]} : vector<8x128xf32> to vector<8x32xf32>
    %196 = arith.mulf %189, %175 : vector<8x32xf32>
    %197 = arith.mulf %188, %194 : vector<8x32xf32>
    %198 = arith.addf %196, %197 : vector<8x32xf32>
    %199 = math.tanh %198 : vector<8x32xf32>
    %200 = arith.mulf %195, %199 : vector<8x32xf32>
    %c56 = arith.constant 56 : index
    %c0_55 = arith.constant 0 : index
    %201 = vector.load %arg14[%c56, %c0_55] : memref<64x32xf32, #tpu.memory_space<vmem>>, vector<8x32xf32>
    tpu.vector_store %arg14[%c56, %c0_55], %200 {strides = array<i32>} : memref<64x32xf32, #tpu.memory_space<vmem>>, vector<8x32xf32>,
    %c0_56 = arith.constant 0 : index
    %c0_57 = arith.constant 0 : index
    %202 = vector.load %arg4[%c0_56, %c0_57] : memref<32x128xbf16, #tpu.memory_space<vmem>>, vector<32x128xbf16>
    %c0_58 = arith.constant 0 : index
    %c0_59 = arith.constant 0 : index
    %203 = vector.load %arg5[%c0_58, %c0_59] : memref<1x128xf32, #tpu.memory_space<vmem>>, vector<1x128xf32>
    %c0_60 = arith.constant 0 : index
    %c0_61 = arith.constant 0 : index
    %204 = vector.load %arg6[%c0_60, %c0_61] : memref<32x128xbf16, #tpu.memory_space<vmem>>, vector<32x128xbf16>
    %c0_62 = arith.constant 0 : index
    %c0_63 = arith.constant 0 : index
    %205 = vector.load %arg14[%c0_62, %c0_63] : memref<64x32xf32, #tpu.memory_space<vmem>>, vector<64x32xf32>
    %206 = arith.truncf %205 : vector<64x32xf32> to vector<64x32xbf16>
    %cst_64 = arith.constant dense<0.000000e+00> : vector<64x128xf32>
    %207 = tpu.matmul %206, %202, %cst_64 {dimension_numbers = #tpu.dot_dimension_numbers<[1], [0], [0], [1], [0, 0, 1, 1], [], []>} : vector<64x32xbf16>, vector<32x128xbf16>, vector<64x128xf32> -> vector<64x128xf32>
    %208 = vector.broadcast %203 : vector<1x128xf32> to vector<64x128xf32>
    %209 = arith.addf %207, %208 : vector<64x128xf32>
    %c1 = arith.constant 1 : index
    %c0_65 = arith.constant 0 : index
    %c0_66 = arith.constant 0 : index
    %210 = vector.load %arg9[%c1, %c0_65, %c0_66] : memref<2x8x32xf32, #tpu.memory_space<vmem>>, vector<1x8x32xf32>
    %211 = vector.shape_cast %210 : vector<1x8x32xf32> to vector<8x32xf32>
    %c1_67 = arith.constant 1 : index
    %c0_68 = arith.constant 0 : index
    %c0_69 = arith.constant 0 : index
    %212 = vector.load %arg10[%c1_67, %c0_68, %c0_69] : memref<2x8x32xf32, #tpu.memory_space<vmem>>, vector<1x8x32xf32>
    %213 = vector.shape_cast %212 : vector<1x8x32xf32> to vector<8x32xf32>
    %214 = arith.truncf %211 : vector<8x32xf32> to vector<8x32xbf16>
    %215 = vector.extract_strided_slice %209 {offsets = [0, 0], sizes = [8, 128], strides = [1, 1]} : vector<64x128xf32> to vector<8x128xf32>
    %cst_70 = arith.constant dense<0.000000e+00> : vector<8x128xf32>
    %216 = tpu.matmul %214, %204, %cst_70 {dimension_numbers = #tpu.dot_dimension_numbers<[1], [0], [0], [1], [0, 0, 1, 1], [], []>} : vector<8x32xbf16>, vector<32x128xbf16>, vector<8x128xf32> -> vector<8x128xf32>
    %217 = arith.addf %215, %216 : vector<8x128xf32>
    %218 = arith.negf %217 : vector<8x128xf32>
    %219 = math.exp %218 : vector<8x128xf32>
    %cst_71 = arith.constant 1.000000e+00 : f32
    %220 = vector.broadcast %cst_71 : f32 to vector<8x128xf32>
    %221 = arith.addf %220, %219 : vector<8x128xf32>
    %222 = arith.divf %220, %221 : vector<8x128xf32>
    %223 = vector.extract_strided_slice %222 {offsets = [0, 0], sizes = [8, 32], strides = [1, 1]} : vector<8x128xf32> to vector<8x32xf32>
    %224 = vector.extract_strided_slice %222 {offsets = [0, 32], sizes = [8, 32], strides = [1, 1]} : vector<8x128xf32> to vector<8x32xf32>
    %225 = vector.extract_strided_slice %222 {offsets = [0, 64], sizes = [8, 32], strides = [1, 1]} : vector<8x128xf32> to vector<8x32xf32>
    %cst_72 = arith.constant 2.000000e+00 : f32
    %226 = vector.broadcast %cst_72 : f32 to vector<8x32xf32>
    %227 = arith.mulf %226, %225 : vector<8x32xf32>
    %cst_73 = arith.constant 1.000000e+00 : f32
    %228 = vector.broadcast %cst_73 : f32 to vector<8x32xf32>
    %229 = arith.subf %227, %228 : vector<8x32xf32>
    %230 = vector.extract_strided_slice %222 {offsets = [0, 96], sizes = [8, 32], strides = [1, 1]} : vector<8x128xf32> to vector<8x32xf32>
    %231 = arith.mulf %224, %213 : vector<8x32xf32>
    %232 = arith.mulf %223, %229 : vector<8x32xf32>
    %233 = arith.addf %231, %232 : vector<8x32xf32>
    %234 = math.tanh %233 : vector<8x32xf32>
    %235 = arith.mulf %230, %234 : vector<8x32xf32>
    %236 = arith.truncf %235 : vector<8x32xf32> to vector<8x32xbf16>
    %c0_74 = arith.constant 0 : index
    %c0_75 = arith.constant 0 : index
    %237 = vector.load %arg14[%c0_74, %c0_75] : memref<64x32xf32, #tpu.memory_space<vmem>>, vector<8x32xf32>
    tpu.vector_store %arg14[%c0_74, %c0_75], %235 {strides = array<i32>} : memref<64x32xf32, #tpu.memory_space<vmem>>, vector<8x32xf32>,
    %238 = vector.extract_strided_slice %209 {offsets = [8, 0], sizes = [8, 128], strides = [1, 1]} : vector<64x128xf32> to vector<8x128xf32>
    %cst_76 = arith.constant dense<0.000000e+00> : vector<8x128xf32>
    %239 = tpu.matmul %236, %204, %cst_76 {dimension_numbers = #tpu.dot_dimension_numbers<[1], [0], [0], [1], [0, 0, 1, 1], [], []>} : vector<8x32xbf16>, vector<32x128xbf16>, vector<8x128xf32> -> vector<8x128xf32>
    %240 = arith.addf %238, %239 : vector<8x128xf32>
    %241 = arith.negf %240 : vector<8x128xf32>
    %242 = math.exp %241 : vector<8x128xf32>
    %cst_77 = arith.constant 1.000000e+00 : f32
    %243 = vector.broadcast %cst_77 : f32 to vector<8x128xf32>
    %244 = arith.addf %243, %242 : vector<8x128xf32>
    %245 = arith.divf %243, %244 : vector<8x128xf32>
    %246 = vector.extract_strided_slice %245 {offsets = [0, 0], sizes = [8, 32], strides = [1, 1]} : vector<8x128xf32> to vector<8x32xf32>
    %247 = vector.extract_strided_slice %245 {offsets = [0, 32], sizes = [8, 32], strides = [1, 1]} : vector<8x128xf32> to vector<8x32xf32>
    %248 = vector.extract_strided_slice %245 {offsets = [0, 64], sizes = [8, 32], strides = [1, 1]} : vector<8x128xf32> to vector<8x32xf32>
    %cst_78 = arith.constant 2.000000e+00 : f32
    %249 = vector.broadcast %cst_78 : f32 to vector<8x32xf32>
    %250 = arith.mulf %249, %248 : vector<8x32xf32>
    %cst_79 = arith.constant 1.000000e+00 : f32
    %251 = vector.broadcast %cst_79 : f32 to vector<8x32xf32>
    %252 = arith.subf %250, %251 : vector<8x32xf32>
    %253 = vector.extract_strided_slice %245 {offsets = [0, 96], sizes = [8, 32], strides = [1, 1]} : vector<8x128xf32> to vector<8x32xf32>
    %254 = arith.mulf %247, %233 : vector<8x32xf32>
    %255 = arith.mulf %246, %252 : vector<8x32xf32>
    %256 = arith.addf %254, %255 : vector<8x32xf32>
    %257 = math.tanh %256 : vector<8x32xf32>
    %258 = arith.mulf %253, %257 : vector<8x32xf32>
    %259 = arith.truncf %258 : vector<8x32xf32> to vector<8x32xbf16>
    %c8_80 = arith.constant 8 : index
    %c0_81 = arith.constant 0 : index
    %260 = vector.load %arg14[%c8_80, %c0_81] : memref<64x32xf32, #tpu.memory_space<vmem>>, vector<8x32xf32>
    tpu.vector_store %arg14[%c8_80, %c0_81], %258 {strides = array<i32>} : memref<64x32xf32, #tpu.memory_space<vmem>>, vector<8x32xf32>,
    %261 = vector.extract_strided_slice %209 {offsets = [16, 0], sizes = [8, 128], strides = [1, 1]} : vector<64x128xf32> to vector<8x128xf32>
    %cst_82 = arith.constant dense<0.000000e+00> : vector<8x128xf32>
    %262 = tpu.matmul %259, %204, %cst_82 {dimension_numbers = #tpu.dot_dimension_numbers<[1], [0], [0], [1], [0, 0, 1, 1], [], []>} : vector<8x32xbf16>, vector<32x128xbf16>, vector<8x128xf32> -> vector<8x128xf32>
    %263 = arith.addf %261, %262 : vector<8x128xf32>
    %264 = arith.negf %263 : vector<8x128xf32>
    %265 = math.exp %264 : vector<8x128xf32>
    %cst_83 = arith.constant 1.000000e+00 : f32
    %266 = vector.broadcast %cst_83 : f32 to vector<8x128xf32>
    %267 = arith.addf %266, %265 : vector<8x128xf32>
    %268 = arith.divf %266, %267 : vector<8x128xf32>
    %269 = vector.extract_strided_slice %268 {offsets = [0, 0], sizes = [8, 32], strides = [1, 1]} : vector<8x128xf32> to vector<8x32xf32>
    %270 = vector.extract_strided_slice %268 {offsets = [0, 32], sizes = [8, 32], strides = [1, 1]} : vector<8x128xf32> to vector<8x32xf32>
    %271 = vector.extract_strided_slice %268 {offsets = [0, 64], sizes = [8, 32], strides = [1, 1]} : vector<8x128xf32> to vector<8x32xf32>
    %cst_84 = arith.constant 2.000000e+00 : f32
    %272 = vector.broadcast %cst_84 : f32 to vector<8x32xf32>
    %273 = arith.mulf %272, %271 : vector<8x32xf32>
    %cst_85 = arith.constant 1.000000e+00 : f32
    %274 = vector.broadcast %cst_85 : f32 to vector<8x32xf32>
    %275 = arith.subf %273, %274 : vector<8x32xf32>
    %276 = vector.extract_strided_slice %268 {offsets = [0, 96], sizes = [8, 32], strides = [1, 1]} : vector<8x128xf32> to vector<8x32xf32>
    %277 = arith.mulf %270, %256 : vector<8x32xf32>
    %278 = arith.mulf %269, %275 : vector<8x32xf32>
    %279 = arith.addf %277, %278 : vector<8x32xf32>
    %280 = math.tanh %279 : vector<8x32xf32>
    %281 = arith.mulf %276, %280 : vector<8x32xf32>
    %282 = arith.truncf %281 : vector<8x32xf32> to vector<8x32xbf16>
    %c16_86 = arith.constant 16 : index
    %c0_87 = arith.constant 0 : index
    %283 = vector.load %arg14[%c16_86, %c0_87] : memref<64x32xf32, #tpu.memory_space<vmem>>, vector<8x32xf32>
    tpu.vector_store %arg14[%c16_86, %c0_87], %281 {strides = array<i32>} : memref<64x32xf32, #tpu.memory_space<vmem>>, vector<8x32xf32>,
    %284 = vector.extract_strided_slice %209 {offsets = [24, 0], sizes = [8, 128], strides = [1, 1]} : vector<64x128xf32> to vector<8x128xf32>
    %cst_88 = arith.constant dense<0.000000e+00> : vector<8x128xf32>
    %285 = tpu.matmul %282, %204, %cst_88 {dimension_numbers = #tpu.dot_dimension_numbers<[1], [0], [0], [1], [0, 0, 1, 1], [], []>} : vector<8x32xbf16>, vector<32x128xbf16>, vector<8x128xf32> -> vector<8x128xf32>
    %286 = arith.addf %284, %285 : vector<8x128xf32>
    %287 = arith.negf %286 : vector<8x128xf32>
    %288 = math.exp %287 : vector<8x128xf32>
    %cst_89 = arith.constant 1.000000e+00 : f32
    %289 = vector.broadcast %cst_89 : f32 to vector<8x128xf32>
    %290 = arith.addf %289, %288 : vector<8x128xf32>
    %291 = arith.divf %289, %290 : vector<8x128xf32>
    %292 = vector.extract_strided_slice %291 {offsets = [0, 0], sizes = [8, 32], strides = [1, 1]} : vector<8x128xf32> to vector<8x32xf32>
    %293 = vector.extract_strided_slice %291 {offsets = [0, 32], sizes = [8, 32], strides = [1, 1]} : vector<8x128xf32> to vector<8x32xf32>
    %294 = vector.extract_strided_slice %291 {offsets = [0, 64], sizes = [8, 32], strides = [1, 1]} : vector<8x128xf32> to vector<8x32xf32>
    %cst_90 = arith.constant 2.000000e+00 : f32
    %295 = vector.broadcast %cst_90 : f32 to vector<8x32xf32>
    %296 = arith.mulf %295, %294 : vector<8x32xf32>
    %cst_91 = arith.constant 1.000000e+00 : f32
    %297 = vector.broadcast %cst_91 : f32 to vector<8x32xf32>
    %298 = arith.subf %296, %297 : vector<8x32xf32>
    %299 = vector.extract_strided_slice %291 {offsets = [0, 96], sizes = [8, 32], strides = [1, 1]} : vector<8x128xf32> to vector<8x32xf32>
    %300 = arith.mulf %293, %279 : vector<8x32xf32>
    %301 = arith.mulf %292, %298 : vector<8x32xf32>
    %302 = arith.addf %300, %301 : vector<8x32xf32>
    %303 = math.tanh %302 : vector<8x32xf32>
    %304 = arith.mulf %299, %303 : vector<8x32xf32>
    %305 = arith.truncf %304 : vector<8x32xf32> to vector<8x32xbf16>
    %c24_92 = arith.constant 24 : index
    %c0_93 = arith.constant 0 : index
    %306 = vector.load %arg14[%c24_92, %c0_93] : memref<64x32xf32, #tpu.memory_space<vmem>>, vector<8x32xf32>
    tpu.vector_store %arg14[%c24_92, %c0_93], %304 {strides = array<i32>} : memref<64x32xf32, #tpu.memory_space<vmem>>, vector<8x32xf32>,
    %307 = vector.extract_strided_slice %209 {offsets = [32, 0], sizes = [8, 128], strides = [1, 1]} : vector<64x128xf32> to vector<8x128xf32>
    %cst_94 = arith.constant dense<0.000000e+00> : vector<8x128xf32>
    %308 = tpu.matmul %305, %204, %cst_94 {dimension_numbers = #tpu.dot_dimension_numbers<[1], [0], [0], [1], [0, 0, 1, 1], [], []>} : vector<8x32xbf16>, vector<32x128xbf16>, vector<8x128xf32> -> vector<8x128xf32>
    %309 = arith.addf %307, %308 : vector<8x128xf32>
    %310 = arith.negf %309 : vector<8x128xf32>
    %311 = math.exp %310 : vector<8x128xf32>
    %cst_95 = arith.constant 1.000000e+00 : f32
    %312 = vector.broadcast %cst_95 : f32 to vector<8x128xf32>
    %313 = arith.addf %312, %311 : vector<8x128xf32>
    %314 = arith.divf %312, %313 : vector<8x128xf32>
    %315 = vector.extract_strided_slice %314 {offsets = [0, 0], sizes = [8, 32], strides = [1, 1]} : vector<8x128xf32> to vector<8x32xf32>
    %316 = vector.extract_strided_slice %314 {offsets = [0, 32], sizes = [8, 32], strides = [1, 1]} : vector<8x128xf32> to vector<8x32xf32>
    %317 = vector.extract_strided_slice %314 {offsets = [0, 64], sizes = [8, 32], strides = [1, 1]} : vector<8x128xf32> to vector<8x32xf32>
    %cst_96 = arith.constant 2.000000e+00 : f32
    %318 = vector.broadcast %cst_96 : f32 to vector<8x32xf32>
    %319 = arith.mulf %318, %317 : vector<8x32xf32>
    %cst_97 = arith.constant 1.000000e+00 : f32
    %320 = vector.broadcast %cst_97 : f32 to vector<8x32xf32>
    %321 = arith.subf %319, %320 : vector<8x32xf32>
    %322 = vector.extract_strided_slice %314 {offsets = [0, 96], sizes = [8, 32], strides = [1, 1]} : vector<8x128xf32> to vector<8x32xf32>
    %323 = arith.mulf %316, %302 : vector<8x32xf32>
    %324 = arith.mulf %315, %321 : vector<8x32xf32>
    %325 = arith.addf %323, %324 : vector<8x32xf32>
    %326 = math.tanh %325 : vector<8x32xf32>
    %327 = arith.mulf %322, %326 : vector<8x32xf32>
    %328 = arith.truncf %327 : vector<8x32xf32> to vector<8x32xbf16>
    %c32_98 = arith.constant 32 : index
    %c0_99 = arith.constant 0 : index
    %329 = vector.load %arg14[%c32_98, %c0_99] : memref<64x32xf32, #tpu.memory_space<vmem>>, vector<8x32xf32>
    tpu.vector_store %arg14[%c32_98, %c0_99], %327 {strides = array<i32>} : memref<64x32xf32, #tpu.memory_space<vmem>>, vector<8x32xf32>,
    %330 = vector.extract_strided_slice %209 {offsets = [40, 0], sizes = [8, 128], strides = [1, 1]} : vector<64x128xf32> to vector<8x128xf32>
    %cst_100 = arith.constant dense<0.000000e+00> : vector<8x128xf32>
    %331 = tpu.matmul %328, %204, %cst_100 {dimension_numbers = #tpu.dot_dimension_numbers<[1], [0], [0], [1], [0, 0, 1, 1], [], []>} : vector<8x32xbf16>, vector<32x128xbf16>, vector<8x128xf32> -> vector<8x128xf32>
    %332 = arith.addf %330, %331 : vector<8x128xf32>
    %333 = arith.negf %332 : vector<8x128xf32>
    %334 = math.exp %333 : vector<8x128xf32>
    %cst_101 = arith.constant 1.000000e+00 : f32
    %335 = vector.broadcast %cst_101 : f32 to vector<8x128xf32>
    %336 = arith.addf %335, %334 : vector<8x128xf32>
    %337 = arith.divf %335, %336 : vector<8x128xf32>
    %338 = vector.extract_strided_slice %337 {offsets = [0, 0], sizes = [8, 32], strides = [1, 1]} : vector<8x128xf32> to vector<8x32xf32>
    %339 = vector.extract_strided_slice %337 {offsets = [0, 32], sizes = [8, 32], strides = [1, 1]} : vector<8x128xf32> to vector<8x32xf32>
    %340 = vector.extract_strided_slice %337 {offsets = [0, 64], sizes = [8, 32], strides = [1, 1]} : vector<8x128xf32> to vector<8x32xf32>
    %cst_102 = arith.constant 2.000000e+00 : f32
    %341 = vector.broadcast %cst_102 : f32 to vector<8x32xf32>
    %342 = arith.mulf %341, %340 : vector<8x32xf32>
    %cst_103 = arith.constant 1.000000e+00 : f32
    %343 = vector.broadcast %cst_103 : f32 to vector<8x32xf32>
    %344 = arith.subf %342, %343 : vector<8x32xf32>
    %345 = vector.extract_strided_slice %337 {offsets = [0, 96], sizes = [8, 32], strides = [1, 1]} : vector<8x128xf32> to vector<8x32xf32>
    %346 = arith.mulf %339, %325 : vector<8x32xf32>
    %347 = arith.mulf %338, %344 : vector<8x32xf32>
    %348 = arith.addf %346, %347 : vector<8x32xf32>
    %349 = math.tanh %348 : vector<8x32xf32>
    %350 = arith.mulf %345, %349 : vector<8x32xf32>
    %351 = arith.truncf %350 : vector<8x32xf32> to vector<8x32xbf16>
    %c40_104 = arith.constant 40 : index
    %c0_105 = arith.constant 0 : index
    %352 = vector.load %arg14[%c40_104, %c0_105] : memref<64x32xf32, #tpu.memory_space<vmem>>, vector<8x32xf32>
    tpu.vector_store %arg14[%c40_104, %c0_105], %350 {strides = array<i32>} : memref<64x32xf32, #tpu.memory_space<vmem>>, vector<8x32xf32>,
    %353 = vector.extract_strided_slice %209 {offsets = [48, 0], sizes = [8, 128], strides = [1, 1]} : vector<64x128xf32> to vector<8x128xf32>
    %cst_106 = arith.constant dense<0.000000e+00> : vector<8x128xf32>
    %354 = tpu.matmul %351, %204, %cst_106 {dimension_numbers = #tpu.dot_dimension_numbers<[1], [0], [0], [1], [0, 0, 1, 1], [], []>} : vector<8x32xbf16>, vector<32x128xbf16>, vector<8x128xf32> -> vector<8x128xf32>
    %355 = arith.addf %353, %354 : vector<8x128xf32>
    %356 = arith.negf %355 : vector<8x128xf32>
    %357 = math.exp %356 : vector<8x128xf32>
    %cst_107 = arith.constant 1.000000e+00 : f32
    %358 = vector.broadcast %cst_107 : f32 to vector<8x128xf32>
    %359 = arith.addf %358, %357 : vector<8x128xf32>
    %360 = arith.divf %358, %359 : vector<8x128xf32>
    %361 = vector.extract_strided_slice %360 {offsets = [0, 0], sizes = [8, 32], strides = [1, 1]} : vector<8x128xf32> to vector<8x32xf32>
    %362 = vector.extract_strided_slice %360 {offsets = [0, 32], sizes = [8, 32], strides = [1, 1]} : vector<8x128xf32> to vector<8x32xf32>
    %363 = vector.extract_strided_slice %360 {offsets = [0, 64], sizes = [8, 32], strides = [1, 1]} : vector<8x128xf32> to vector<8x32xf32>
    %cst_108 = arith.constant 2.000000e+00 : f32
    %364 = vector.broadcast %cst_108 : f32 to vector<8x32xf32>
    %365 = arith.mulf %364, %363 : vector<8x32xf32>
    %cst_109 = arith.constant 1.000000e+00 : f32
    %366 = vector.broadcast %cst_109 : f32 to vector<8x32xf32>
    %367 = arith.subf %365, %366 : vector<8x32xf32>
    %368 = vector.extract_strided_slice %360 {offsets = [0, 96], sizes = [8, 32], strides = [1, 1]} : vector<8x128xf32> to vector<8x32xf32>
    %369 = arith.mulf %362, %348 : vector<8x32xf32>
    %370 = arith.mulf %361, %367 : vector<8x32xf32>
    %371 = arith.addf %369, %370 : vector<8x32xf32>
    %372 = math.tanh %371 : vector<8x32xf32>
    %373 = arith.mulf %368, %372 : vector<8x32xf32>
    %374 = arith.truncf %373 : vector<8x32xf32> to vector<8x32xbf16>
    %c48_110 = arith.constant 48 : index
    %c0_111 = arith.constant 0 : index
    %375 = vector.load %arg14[%c48_110, %c0_111] : memref<64x32xf32, #tpu.memory_space<vmem>>, vector<8x32xf32>
    tpu.vector_store %arg14[%c48_110, %c0_111], %373 {strides = array<i32>} : memref<64x32xf32, #tpu.memory_space<vmem>>, vector<8x32xf32>,
    %376 = vector.extract_strided_slice %209 {offsets = [56, 0], sizes = [8, 128], strides = [1, 1]} : vector<64x128xf32> to vector<8x128xf32>
    %cst_112 = arith.constant dense<0.000000e+00> : vector<8x128xf32>
    %377 = tpu.matmul %374, %204, %cst_112 {dimension_numbers = #tpu.dot_dimension_numbers<[1], [0], [0], [1], [0, 0, 1, 1], [], []>} : vector<8x32xbf16>, vector<32x128xbf16>, vector<8x128xf32> -> vector<8x128xf32>
    %378 = arith.addf %376, %377 : vector<8x128xf32>
    %379 = arith.negf %378 : vector<8x128xf32>
    %380 = math.exp %379 : vector<8x128xf32>
    %cst_113 = arith.constant 1.000000e+00 : f32
    %381 = vector.broadcast %cst_113 : f32 to vector<8x128xf32>
    %382 = arith.addf %381, %380 : vector<8x128xf32>
    %383 = arith.divf %381, %382 : vector<8x128xf32>
    %384 = vector.extract_strided_slice %383 {offsets = [0, 0], sizes = [8, 32], strides = [1, 1]} : vector<8x128xf32> to vector<8x32xf32>
    %385 = vector.extract_strided_slice %383 {offsets = [0, 32], sizes = [8, 32], strides = [1, 1]} : vector<8x128xf32> to vector<8x32xf32>
    %386 = vector.extract_strided_slice %383 {offsets = [0, 64], sizes = [8, 32], strides = [1, 1]} : vector<8x128xf32> to vector<8x32xf32>
    %cst_114 = arith.constant 2.000000e+00 : f32
    %387 = vector.broadcast %cst_114 : f32 to vector<8x32xf32>
    %388 = arith.mulf %387, %386 : vector<8x32xf32>
    %cst_115 = arith.constant 1.000000e+00 : f32
    %389 = vector.broadcast %cst_115 : f32 to vector<8x32xf32>
    %390 = arith.subf %388, %389 : vector<8x32xf32>
    %391 = vector.extract_strided_slice %383 {offsets = [0, 96], sizes = [8, 32], strides = [1, 1]} : vector<8x128xf32> to vector<8x32xf32>
    %392 = arith.mulf %385, %371 : vector<8x32xf32>
    %393 = arith.mulf %384, %390 : vector<8x32xf32>
    %394 = arith.addf %392, %393 : vector<8x32xf32>
    %395 = math.tanh %394 : vector<8x32xf32>
    %396 = arith.mulf %391, %395 : vector<8x32xf32>
    %c56_116 = arith.constant 56 : index
    %c0_117 = arith.constant 0 : index
    %397 = vector.load %arg14[%c56_116, %c0_117] : memref<64x32xf32, #tpu.memory_space<vmem>>, vector<8x32xf32>
    tpu.vector_store %arg14[%c56_116, %c0_117], %396 {strides = array<i32>} : memref<64x32xf32, #tpu.memory_space<vmem>>, vector<8x32xf32>,
    %c0_118 = arith.constant 0 : index
    %c0_119 = arith.constant 0 : index
    %398 = vector.load %arg14[%c0_118, %c0_119] : memref<64x32xf32, #tpu.memory_space<vmem>>, vector<64x32xf32>
    %399 = arith.truncf %398 : vector<64x32xf32> to vector<64x32xbf16>
    %c0_120 = arith.constant 0 : index
    %c0_121 = arith.constant 0 : index
    %400 = vector.load %arg7[%c0_120, %c0_121] : memref<32x128xbf16, #tpu.memory_space<vmem>>, vector<32x128xbf16>
    %cst_122 = arith.constant dense<0.000000e+00> : vector<64x128xf32>
    %401 = tpu.matmul %399, %400, %cst_122 {dimension_numbers = #tpu.dot_dimension_numbers<[1], [0], [0], [1], [0, 0, 1, 1], [], []>} : vector<64x32xbf16>, vector<32x128xbf16>, vector<64x128xf32> -> vector<64x128xf32>
    %c0_123 = arith.constant 0 : index
    %c0_124 = arith.constant 0 : index
    %402 = vector.load %arg8[%c0_123, %c0_124] : memref<1x128xf32, #tpu.memory_space<vmem>>, vector<1x128xf32>
    %403 = vector.broadcast %402 : vector<1x128xf32> to vector<64x128xf32>
    %404 = arith.addf %401, %403 : vector<64x128xf32>
    %c0_125 = arith.constant 0 : index
    %c0_126 = arith.constant 0 : index
    %405 = vector.load %arg11[%c0_125, %c0_126] : memref<64x128xf32, #tpu.memory_space<vmem>>, vector<64x128xf32>
    tpu.vector_store %arg11[%c0_125, %c0_126], %404 {strides = array<i32>} : memref<64x128xf32, #tpu.memory_space<vmem>>, vector<64x128xf32>,
    %406 = tpu.concatenate %200, %396 in 0 : vector<8x32xf32>, vector<8x32xf32> -> vector<16x32xf32>
    %c0_127 = arith.constant 0 : index
    %c0_128 = arith.constant 0 : index
    %407 = vector.load %arg12[%c0_127, %c0_128] : memref<16x32xf32, #tpu.memory_space<vmem>>, vector<16x32xf32>
    tpu.vector_store %arg12[%c0_127, %c0_128], %406 {strides = array<i32>} : memref<16x32xf32, #tpu.memory_space<vmem>>, vector<16x32xf32>,
    %408 = tpu.concatenate %198, %394 in 0 : vector<8x32xf32>, vector<8x32xf32> -> vector<16x32xf32>
    %c0_129 = arith.constant 0 : index
    %c0_130 = arith.constant 0 : index
    %409 = vector.load %arg13[%c0_129, %c0_130] : memref<16x32xf32, #tpu.memory_space<vmem>>, vector<16x32xf32>
    tpu.vector_store %arg13[%c0_129, %c0_130], %408 {strides = array<i32>} : memref<16x32xf32, #tpu.memory_space<vmem>>, vector<16x32xf32>,
    return
  }
}

</mosaic_0001>

<llo_original>
// kernel: tpu_custom_call.1
$region0: #{tpu_custom_call.1}
  #allocation0 [shape = 'u32[]', space=smem, size = 0x4, offset = 0x4, fixed_abs, tag = 'smem constant byte address 0x4 - core index']
  #allocation1 [shape = 'u32[144,128]{1,0:T(1,128)}', space=vmem, size = 0x12000, scoped, tag = 'internal scratch']
  #allocation2 [shape = 'f32[64,32]{1,0:T(8,128)}', space=vmem, size = 0x8000, scoped, tag = 'scratch operand']
  %s0 = inlined_call_operand.vmem [shape: s32[64,1], index: 0, kind: input, shape index: {}]
  %s1 = inlined_call_operand.vmem [shape: bf16[32,128], index: 1, kind: input, shape index: {}]
  %s2 = inlined_call_operand.hbm [shape: f32[1,128], index: 2, kind: input, shape index: {}]
  %s3 = inlined_call_operand.vmem [shape: bf16[32,128], index: 3, kind: input, shape index: {}]
  %s4 = inlined_call_operand.vmem [shape: bf16[32,128], index: 4, kind: input, shape index: {}]
  %s5 = inlined_call_operand.vmem [shape: f32[1,128], index: 5, kind: input, shape index: {}]
  %s6 = inlined_call_operand.vmem [shape: bf16[32,128], index: 6, kind: input, shape index: {}]
  %s7 = inlined_call_operand.vmem [shape: bf16[32,128], index: 7, kind: input, shape index: {}]
  %s8 = inlined_call_operand.vmem [shape: f32[1,128], index: 8, kind: input, shape index: {}]
  %s9 = inlined_call_operand.vmem [shape: f32[2,8,32], index: 9, kind: input, shape index: {}]
  %s10 = inlined_call_operand.hbm [shape: f32[2,8,32], index: 10, kind: input, shape index: {}]
  %s11 = inlined_call_operand.hbm [shape: f32[64,128], index: 11, kind: output, shape index: {0}]
  %s12 = inlined_call_operand.hbm [shape: f32[16,32], index: 12, kind: output, shape index: {1}]
  %s13 = inlined_call_operand.hbm [shape: f32[16,32], index: 13, kind: output, shape index: {2}]
  %14 = xla_tuple %s11, %s12, %s13
  %s15 = sld [smem:[#allocation0]]
  $region78: #{tpu_custom_call.1} parent=0
    _
  %s17 = ssub.s32 1, %s15
  %s18 = scalar_select 0, %s17, %s15
  $region1: #{tpu_custom_call.1} parent=0
    #allocation3 [shape = 'u8[512]{0}', space=vmem, size = 0x400, scoped, tag = 'input window, operand 2, single buffered']
    #allocation4 [shape = 's32[1]{0}', space=sflag, size = 0x4, scoped, tag = 'scoped memory for tpu_custom_call.1']
    #allocation5 [shape = 's32[1]{0}', space=sflag, size = 0x4, scoped, tag = 'scoped memory for tpu_custom_call.1']
    #allocation6 [shape = 'u8[8192]{0}', space=vmem, size = 0x2000, scoped, tag = 'input window, operand 10, single buffered']
    #allocation7 [shape = 's32[1]{0}', space=sflag, size = 0x4, scoped, tag = 'scoped memory for tpu_custom_call.1']
    #allocation8 [shape = 'u8[32768]{0}', space=vmem, size = 0x8000, scoped, tag = 'output window, operand 0, single buffered']
    #allocation9 [shape = 'u8[8192]{0}', space=vmem, size = 0x2000, scoped, tag = 'output window, operand 1, single buffered']
    #allocation10 [shape = 's32[1]{0}', space=sflag, size = 0x4, scoped, tag = 'scoped memory for tpu_custom_call.1']
    #allocation11 [shape = 'u8[8192]{0}', space=vmem, size = 0x2000, scoped, tag = 'output window, operand 2, single buffered']
    %19 = vsyncpa [#allocation4], 0
    %20 = vsyncpa [#allocation7], 0
    %21 = vsyncpa [#allocation5], 0
    %22 = vsyncpa [#allocation10], 0
    // Predicated region
    $region2: #{tpu_custom_call.1} parent=1 // pred_check
      _
    $region3: #{tpu_custom_call.1} parent=1 // pred_check_branch
      %24 = sbr.rel (0) target = $region5
    $region4: #{tpu_custom_call.1} parent=1 // pred_region
      _
    $region5: #{tpu_custom_call.1} parent=1 // pred_fallthru
      _
    // Predicated region
    $region6: #{tpu_custom_call.1} parent=1 // pred_check
      _
    $region7: #{tpu_custom_call.1} parent=1 // pred_check_branch
      %26 = sbr.rel (0) target = $region9
    $region8: #{tpu_custom_call.1} parent=1 // pred_region
      _
    $region9: #{tpu_custom_call.1} parent=1 // pred_fallthru
      _
    // Predicated region
    $region10: #{tpu_custom_call.1} parent=1 // pred_check
      _
    $region11: #{tpu_custom_call.1} parent=1 // pred_check_branch
      %28 = sbr.rel (0) target = $region13
    $region12: #{tpu_custom_call.1} parent=1 // pred_region
      %s30 = ssub.s32 16, 16
      %31 = vsyncadd [#allocation4], %s30
      %s33 = sshll.u32 [#allocation3], 4
      %s34 = int_to_ptr.vmem [resolvable:$true] %s33
      %36 = dma.hbm_to_vmem [thread:$0]  %s2, 16, %s34, [#allocation4]
    $region13: #{tpu_custom_call.1} parent=1 // pred_fallthru
      _
    // Predicated region
    $region14: #{tpu_custom_call.1} parent=1 // pred_check
      _
    $region15: #{tpu_custom_call.1} parent=1 // pred_check_branch
      %38 = sbr.rel (0) target = $region17
    $region16: #{tpu_custom_call.1} parent=1 // pred_region
      _
    $region17: #{tpu_custom_call.1} parent=1 // pred_fallthru
      _
    // Predicated region
    $region18: #{tpu_custom_call.1} parent=1 // pred_check
      _
    $region19: #{tpu_custom_call.1} parent=1 // pred_check_branch
      %40 = sbr.rel (0) target = $region21
    $region20: #{tpu_custom_call.1} parent=1 // pred_region
      _
    $region21: #{tpu_custom_call.1} parent=1 // pred_fallthru
      _
    // Predicated region
    $region22: #{tpu_custom_call.1} parent=1 // pred_check
      _
    $region23: #{tpu_custom_call.1} parent=1 // pred_check_branch
      %42 = sbr.rel (0) target = $region25
    $region24: #{tpu_custom_call.1} parent=1 // pred_region
      _
    $region25: #{tpu_custom_call.1} parent=1 // pred_fallthru
      _
    // Predicated region
    $region26: #{tpu_custom_call.1} parent=1 // pred_check
      _
    $region27: #{tpu_custom_call.1} parent=1 // pred_check_branch
      %44 = sbr.rel (0) target = $region29
    $region28: #{tpu_custom_call.1} parent=1 // pred_region
      _
    $region29: #{tpu_custom_call.1} parent=1 // pred_fallthru
      _
    // Predicated region
    $region30: #{tpu_custom_call.1} parent=1 // pred_check
      _
    $region31: #{tpu_custom_call.1} parent=1 // pred_check_branch
      %46 = sbr.rel (0) target = $region33
    $region32: #{tpu_custom_call.1} parent=1 // pred_region
      _
    $region33: #{tpu_custom_call.1} parent=1 // pred_fallthru
      _
    // Predicated region
    $region34: #{tpu_custom_call.1} parent=1 // pred_check
      _
    $region35: #{tpu_custom_call.1} parent=1 // pred_check_branch
      %48 = sbr.rel (0) target = $region37
    $region36: #{tpu_custom_call.1} parent=1 // pred_region
      _
    $region37: #{tpu_custom_call.1} parent=1 // pred_fallthru
      _
    // Predicated region
    $region38: #{tpu_custom_call.1} parent=1 // pred_check
      _
    $region39: #{tpu_custom_call.1} parent=1 // pred_check_branch
      %50 = sbr.rel (0) target = $region41
    $region40: #{tpu_custom_call.1} parent=1 // pred_region
      _
    $region41: #{tpu_custom_call.1} parent=1 // pred_fallthru
      _
    // Predicated region
    $region42: #{tpu_custom_call.1} parent=1 // pred_check
      _
    $region43: #{tpu_custom_call.1} parent=1 // pred_check_branch
      %52 = sbr.rel (0) target = $region45
    $region44: #{tpu_custom_call.1} parent=1 // pred_region
      %s54 = ssub.s32 256, 256
      %55 = vsyncadd [#allocation7], %s54
      %s56 = sshll.u32 [#allocation6], 4
      %s57 = int_to_ptr.vmem [resolvable:$true] %s56
      %62 = dma.hbm_to_vmem [thread:$0]  %s10, 256, %s57, [#allocation7], 128, 128, 8
    $region45: #{tpu_custom_call.1} parent=1 // pred_fallthru
      _
    // Predicated region
    $region46: #{tpu_custom_call.1} parent=1 // pred_check
      _
    $region47: #{tpu_custom_call.1} parent=1 // pred_check_branch
      %64 = sbr.rel (0) target = $region49
    $region48: #{tpu_custom_call.1} parent=1 // pred_region
      %65 = dma.done [#allocation4], 16
    $region49: #{tpu_custom_call.1} parent=1 // pred_fallthru
      _
    // Predicated region
    $region50: #{tpu_custom_call.1} parent=1 // pred_check
      _
    $region51: #{tpu_custom_call.1} parent=1 // pred_check_branch
      %67 = sbr.rel (0) target = $region53
    $region52: #{tpu_custom_call.1} parent=1 // pred_region
      %68 = dma.done [#allocation7], 256
    $region53: #{tpu_custom_call.1} parent=1 // pred_fallthru
      _
    %v70 = vld [vmem:[%s0] sm:$0xff]
    %v71 = vld [vmem:[%s0 + $0x8] sm:$0xff]
    %v72 = vld [vmem:[%s0 + $0x10] sm:$0xff]
    %v73 = vld [vmem:[%s0 + $0x18] sm:$0xff]
    %v74 = vld [vmem:[%s0 + $0x20] sm:$0xff]
    %v75 = vld [vmem:[%s0 + $0x28] sm:$0xff]
    %v76 = vld [vmem:[%s0 + $0x30] sm:$0xff]
    %v77 = vld [vmem:[%s0 + $0x38] sm:$0xff]
    %v78 = vlaneseq
    %v79 = vand.u32 %v78, 127
    %80 = vset.pattern.permute.xlu0 0
    %81 = vperm.xlu0 %80, %v70
    %v82 = vpop.permute.xlu0 %81
    %83 = vset.pattern.permute.xlu0 0
    %84 = vperm.xlu0 %83, %v71
    %v85 = vpop.permute.xlu0 %84
    %86 = vset.pattern.permute.xlu0 0
    %87 = vperm.xlu0 %86, %v72
    %v88 = vpop.permute.xlu0 %87
    %89 = vset.pattern.permute.xlu0 0
    %90 = vperm.xlu0 %89, %v73
    %v91 = vpop.permute.xlu0 %90
    %92 = vset.pattern.permute.xlu0 0
    %93 = vperm.xlu0 %92, %v74
    %v94 = vpop.permute.xlu0 %93
    %95 = vset.pattern.permute.xlu0 0
    %96 = vperm.xlu0 %95, %v75
    %v97 = vpop.permute.xlu0 %96
    %98 = vset.pattern.permute.xlu0 0
    %99 = vperm.xlu0 %98, %v76
    %v100 = vpop.permute.xlu0 %99
    %101 = vset.pattern.permute.xlu0 0
    %102 = vperm.xlu0 %101, %v77
    %v103 = vpop.permute.xlu0 %102
    %vm104 = vcmp.eq.s32.totalorder %v82, %v79
    %vm105 = vcmp.eq.s32.totalorder %v85, %v79
    %vm106 = vcmp.eq.s32.totalorder %v88, %v79
    %vm107 = vcmp.eq.s32.totalorder %v91, %v79
    %vm108 = vcmp.eq.s32.totalorder %v94, %v79
    %vm109 = vcmp.eq.s32.totalorder %v97, %v79
    %vm110 = vcmp.eq.s32.totalorder %v100, %v79
    %vm111 = vcmp.eq.s32.totalorder %v103, %v79
    %v112 = vsel %vm104, 1.0, 0.0
    %v113 = vsel %vm105, 1.0, 0.0
    %v114 = vsel %vm106, 1.0, 0.0
    %v115 = vsel %vm107, 1.0, 0.0
    %v116 = vsel %vm108, 1.0, 0.0
    %v117 = vsel %vm109, 1.0, 0.0
    %v118 = vsel %vm110, 1.0, 0.0
    %v119 = vsel %vm111, 1.0, 0.0
    %v120 = vpack.c.bf16 %v113, %v112
    %v121 = vpack.c.bf16 %v115, %v114
    %v122 = vpack.c.bf16 %v117, %v116
    %v123 = vpack.c.bf16 %v119, %v118
    %v124 = vld [vmem:[%s1] sm:$0xf]
    %v125 = vld [vmem:[%s1 + $0x4] sm:$0xf]
    %v126 = vld [vmem:[%s1 + $0x8] sm:$0xf]
    %v127 = vld [vmem:[%s1 + $0xc] sm:$0xf]
    %v128 = vld [vmem:[#allocation3] sm:$0x1]
    %v129 = vld [vmem:[%s3] sm:$0xf]
    %v130 = vld [vmem:[%s3 + $0x4] sm:$0xf]
    %v131 = vld [vmem:[%s3 + $0x8] sm:$0xf]
    %v132 = vld [vmem:[%s3 + $0xc] sm:$0xf]
    %v134 = vlaneseq
    %v135 = vshrl.u32 %v134, 7
    %v136 = vsub.s32 0, %v135
    %v137 = vrot.slane %v128, %v136
    %v143 = vunpack.c.l.b16 %v124
    %v144 = vunpack.c.l.b16 %v125
    %v145 = vunpack.c.l.b16 %v126
    %v146 = vunpack.c.l.b16 %v127
    %v147 = vpack.c.b16 %v144, %v143
    %v148 = vpack.c.b16 %v146, %v145
    %vm151 = vcmask 261120
    %v153 = vsel %vm151, %v120, 0
    %v156 = vsel %vm151, %v121, 0
    %v159 = vsel %vm151, %v122, 0
    %v162 = vsel %vm151, %v123, 0
    %164 = vmatprep.subr.bf16.mxu0 0
    %165 = vmatpush1.bf16.msra.mxu0 %v147
    %166 = vmatprep.subr.bf16.mxu0 0
    %167 = vmatpush1.bf16.msra.mxu0 %v148
    %168 = vmatprep.subr.bf16.mxu0 0
    %169 = vmatpush1.bf16.msra.mxu0 0
    %170 = vmatprep.subr.bf16.mxu0 0
    %171 = vmatpush1.bf16.msra.mxu0 0
    %172 = vmatprep.subr.bf16.mxu0 0
    %173 = vmatpush1.bf16.msra.mxu0 0
    %174 = vmatprep.subr.bf16.mxu0 0
    %175 = vmatpush1.bf16.msra.mxu0 0
    %176 = vmatprep.subr.bf16.mxu0 0
    %177 = vmatpush1.bf16.msra.mxu0 0
    %178 = vmatprep.subr.bf16.mxu0 0
    %179 = vmatpush1.bf16.msra.mxu0 0
    %180 = vmatprep.subr.bf16.mxu0 0
    %181 = vmatpush1.bf16.msra.mxu0 0
    %182 = vmatprep.subr.bf16.mxu0 0
    %183 = vmatpush1.bf16.msra.mxu0 0
    %184 = vmatprep.subr.bf16.mxu0 0
    %185 = vmatpush1.bf16.msra.mxu0 0
    %186 = vmatprep.subr.bf16.mxu0 0
    %187 = vmatpush1.bf16.msra.mxu0 0
    %188 = vmatprep.subr.bf16.mxu0 0
    %189 = vmatpush1.bf16.msra.mxu0 0
    %190 = vmatprep.subr.bf16.mxu0 0
    %191 = vmatpush1.bf16.msra.mxu0 0
    %192 = vmatprep.subr.bf16.mxu0 0
    %193 = vmatpush1.bf16.msra.mxu0 0
    %194 = vmatprep.subr.bf16.mxu0 0
    %195 = vmatpush1.bf16.msra.mxu0 0
    %196 = vmatprep.mubr.bf16.mxu0 0
    %197 = vmatmul.mubr.bf16.gmra.mrb[0].mxu0 %v153
    %v198 = vpop.f32.mrb[0].mxu0
    %v199 = vadd.f32 %v137, %v198
    %v200 = vpop.f32.mrb[0].mxu0
    %v201 = vpop.f32.mrb[0].mxu0
    %v202 = vadd.f32 %v137, %v201
    %v203 = vpop.f32.mrb[0].mxu0
    %204 = vmatprep.mubr.bf16.mxu0 0
    %205 = vmatmul.mubr.bf16.gmra.mrb[0].mxu0 %v156
    %v206 = vpop.f32.mrb[0].mxu0
    %v207 = vadd.f32 %v137, %v206
    %v208 = vpop.f32.mrb[0].mxu0
    %v209 = vpop.f32.mrb[0].mxu0
    %v210 = vadd.f32 %v137, %v209
    %v211 = vpop.f32.mrb[0].mxu0
    %212 = vmatprep.mubr.bf16.mxu0 0
    %213 = vmatmul.mubr.bf16.gmra.mrb[0].mxu0 %v159
    %v214 = vpop.f32.mrb[0].mxu0
    %v215 = vadd.f32 %v137, %v214
    %v216 = vpop.f32.mrb[0].mxu0
    %v217 = vpop.f32.mrb[0].mxu0
    %v218 = vadd.f32 %v137, %v217
    %v219 = vpop.f32.mrb[0].mxu0
    %220 = vmatprep.mubr.bf16.mxu0 0
    %221 = vmatmul.mubr.bf16.gmra.mrb[0].mxu0 %v162
    %v222 = vpop.f32.mrb[0].mxu0
    %v223 = vadd.f32 %v137, %v222
    %v224 = vpop.f32.mrb[0].mxu0
    %v225 = vpop.f32.mrb[0].mxu0
    %v226 = vadd.f32 %v137, %v225
    %v227 = vpop.f32.mrb[0].mxu0
    %228 = vdwg.mxu0
    %v229 = vld [vmem:[%s9] sm:$0xff]
    %v230 = vld [vmem:[#allocation6] sm:$0xff]
    %v231 = vpack.c.bf16 %v229, %v229
    %v236 = vunpack.c.l.b16 %v129
    %v237 = vunpack.c.l.b16 %v130
    %v238 = vunpack.c.l.b16 %v131
    %v239 = vunpack.c.l.b16 %v132
    %v240 = vpack.c.b16 %v237, %v236
    %v241 = vpack.c.b16 %v239, %v238
    %v245 = vsel %vm151, %v231, 0
    %247 = vmatprep.subr.bf16.mxu0 0
    %248 = vmatpush1.bf16.msra.mxu0 %v240
    %249 = vmatprep.subr.bf16.mxu0 0
    %250 = vmatpush1.bf16.msra.mxu0 %v241
    %251 = vmatprep.subr.bf16.mxu0 0
    %252 = vmatpush1.bf16.msra.mxu0 0
    %253 = vmatprep.subr.bf16.mxu0 0
    %254 = vmatpush1.bf16.msra.mxu0 0
    %255 = vmatprep.subr.bf16.mxu0 0
    %256 = vmatpush1.bf16.msra.mxu0 0
    %257 = vmatprep.subr.bf16.mxu0 0
    %258 = vmatpush1.bf16.msra.mxu0 0
    %259 = vmatprep.subr.bf16.mxu0 0
    %260 = vmatpush1.bf16.msra.mxu0 0
    %261 = vmatprep.subr.bf16.mxu0 0
    %262 = vmatpush1.bf16.msra.mxu0 0
    %263 = vmatprep.subr.bf16.mxu0 0
    %264 = vmatpush1.bf16.msra.mxu0 0
    %265 = vmatprep.subr.bf16.mxu0 0
    %266 = vmatpush1.bf16.msra.mxu0 0
    %267 = vmatprep.subr.bf16.mxu0 0
    %268 = vmatpush1.bf16.msra.mxu0 0
    %269 = vmatprep.subr.bf16.mxu0 0
    %270 = vmatpush1.bf16.msra.mxu0 0
    %271 = vmatprep.subr.bf16.mxu0 0
    %272 = vmatpush1.bf16.msra.mxu0 0
    %273 = vmatprep.subr.bf16.mxu0 0
    %274 = vmatpush1.bf16.msra.mxu0 0
    %275 = vmatprep.subr.bf16.mxu0 0
    %276 = vmatpush1.bf16.msra.mxu0 0
    %277 = vmatprep.subr.bf16.mxu0 0
    %278 = vmatpush1.bf16.msra.mxu0 0
    %279 = vmatprep.mubr.bf16.mxu0 0
    %280 = vmatmul.mubr.bf16.gmra.mrb[0].mxu0 %v245
    %v281 = vpop.f32.mrb[0].mxu0
    %v282 = vadd.f32 0.0, %v281
    %v283 = vpop.f32.mrb[0].mxu0
    %v284 = vpop.f32.mrb[0].mxu0
    %v285 = vpop.f32.mrb[0].mxu0
    %286 = vdwg.mxu0
    %v287 = vadd.f32 %v199, %v282
    %v288 = vxor.u32 %v287, 2147483648
    %v289 = vmul.f32 %v288, 1.442695
    %v290 = vpow.pop %v289
    %v291 = vadd.f32 %v290, 1.0
    %v292 = vrcp.pop %v291
    %v293 = vmul.f32 1.0, %v292
    %v294 = vmul.f32 %v293, 2.0
    %v295 = vsub.f32 %v294, 1.0
    %297 = vrot.lane.b32.xlu0 %v230, 32
    %v298 = vpop.permute.xlu0 %297
    %v300 = vmul.f32 %v293, %v298
    %302 = vrot.lane.b32.xlu0 %v295, 64
    %v303 = vpop.permute.xlu0 %302
    %v305 = vmul.f32 %v293, %v303
    %307 = vrot.lane.b32.xlu0 %v305, 32
    %v308 = vpop.permute.xlu0 %307
    %v310 = vadd.f32 %v300, %v308
    %v311 = vtanh.pop %v310
    %313 = vrot.lane.b32.xlu0 %v311, 64
    %v314 = vpop.permute.xlu0 %313
    %v316 = vmul.f32 %v293, %v314
    %v317 = vpack.c.bf16 %v316, %v316
    %319 = vrot.lane.b32.xlu0 %v316, 32
    %v320 = vpop.permute.xlu0 %319
    %322 = vst.msk [vmem:[#allocation2] sm:$0xff] %vm151, %v320
    %324 = vrot.lane.b32.xlu0 %v317, 32
    %v325 = vpop.permute.xlu0 %324
    %v327 = vsel %vm151, %v325, 0
    %329 = vmatprep.subr.bf16.mxu0 0
    %330 = vmatpush1.bf16.msra.mxu0 %v240
    %331 = vmatprep.subr.bf16.mxu0 0
    %332 = vmatpush1.bf16.msra.mxu0 %v241
    %333 = vmatprep.subr.bf16.mxu0 0
    %334 = vmatpush1.bf16.msra.mxu0 0
    %335 = vmatprep.subr.bf16.mxu0 0
    %336 = vmatpush1.bf16.msra.mxu0 0
    %337 = vmatprep.subr.bf16.mxu0 0
    %338 = vmatpush1.bf16.msra.mxu0 0
    %339 = vmatprep.subr.bf16.mxu0 0
    %340 = vmatpush1.bf16.msra.mxu0 0
    %341 = vmatprep.subr.bf16.mxu0 0
    %342 = vmatpush1.bf16.msra.mxu0 0
    %343 = vmatprep.subr.bf16.mxu0 0
    %344 = vmatpush1.bf16.msra.mxu0 0
    %345 = vmatprep.subr.bf16.mxu0 0
    %346 = vmatpush1.bf16.msra.mxu0 0
    %347 = vmatprep.subr.bf16.mxu0 0
    %348 = vmatpush1.bf16.msra.mxu0 0
    %349 = vmatprep.subr.bf16.mxu0 0
    %350 = vmatpush1.bf16.msra.mxu0 0
    %351 = vmatprep.subr.bf16.mxu0 0
    %352 = vmatpush1.bf16.msra.mxu0 0
    %353 = vmatprep.subr.bf16.mxu0 0
    %354 = vmatpush1.bf16.msra.mxu0 0
    %355 = vmatprep.subr.bf16.mxu0 0
    %356 = vmatpush1.bf16.msra.mxu0 0
    %357 = vmatprep.subr.bf16.mxu0 0
    %358 = vmatpush1.bf16.msra.mxu0 0
    %359 = vmatprep.subr.bf16.mxu0 0
    %360 = vmatpush1.bf16.msra.mxu0 0
    %361 = vmatprep.mubr.bf16.mxu0 0
    %362 = vmatmul.mubr.bf16.gmra.mrb[0].mxu0 %v327
    %v363 = vpop.f32.mrb[0].mxu0
    %v364 = vadd.f32 0.0, %v363
    %v365 = vpop.f32.mrb[0].mxu0
    %v366 = vpop.f32.mrb[0].mxu0
    %v367 = vpop.f32.mrb[0].mxu0
    %368 = vdwg.mxu0
    %v369 = vadd.f32 %v202, %v364
    %v370 = vxor.u32 %v369, 2147483648
    %v371 = vmul.f32 %v370, 1.442695
    %v372 = vpow.pop %v371
    %v373 = vadd.f32 %v372, 1.0
    %v374 = vrcp.pop %v373
    %v375 = vmul.f32 1.0, %v374
    %v376 = vmul.f32 %v375, 2.0
    %v377 = vsub.f32 %v376, 1.0
    %v378 = vmul.f32 %v375, %v310
    %380 = vrot.lane.b32.xlu0 %v377, 64
    %v381 = vpop.permute.xlu0 %380
    %v383 = vmul.f32 %v375, %v381
    %385 = vrot.lane.b32.xlu0 %v383, 32
    %v386 = vpop.permute.xlu0 %385
    %v388 = vadd.f32 %v378, %v386
    %v389 = vtanh.pop %v388
    %391 = vrot.lane.b32.xlu0 %v389, 64
    %v392 = vpop.permute.xlu0 %391
    %v394 = vmul.f32 %v375, %v392
    %v395 = vpack.c.bf16 %v394, %v394
    %397 = vrot.lane.b32.xlu0 %v394, 32
    %v398 = vpop.permute.xlu0 %397
    %400 = vst.msk [vmem:[#allocation2 + $0x8] sm:$0xff] %vm151, %v398
    %402 = vrot.lane.b32.xlu0 %v395, 32
    %v403 = vpop.permute.xlu0 %402
    %v405 = vsel %vm151, %v403, 0
    %407 = vmatprep.subr.bf16.mxu0 0
    %408 = vmatpush1.bf16.msra.mxu0 %v240
    %409 = vmatprep.subr.bf16.mxu0 0
    %410 = vmatpush1.bf16.msra.mxu0 %v241
    %411 = vmatprep.subr.bf16.mxu0 0
    %412 = vmatpush1.bf16.msra.mxu0 0
    %413 = vmatprep.subr.bf16.mxu0 0
    %414 = vmatpush1.bf16.msra.mxu0 0
    %415 = vmatprep.subr.bf16.mxu0 0
    %416 = vmatpush1.bf16.msra.mxu0 0
    %417 = vmatprep.subr.bf16.mxu0 0
    %418 = vmatpush1.bf16.msra.mxu0 0
    %419 = vmatprep.subr.bf16.mxu0 0
    %420 = vmatpush1.bf16.msra.mxu0 0
    %421 = vmatprep.subr.bf16.mxu0 0
    %422 = vmatpush1.bf16.msra.mxu0 0
    %423 = vmatprep.subr.bf16.mxu0 0
    %424 = vmatpush1.bf16.msra.mxu0 0
    %425 = vmatprep.subr.bf16.mxu0 0
    %426 = vmatpush1.bf16.msra.mxu0 0
    %427 = vmatprep.subr.bf16.mxu0 0
    %428 = vmatpush1.bf16.msra.mxu0 0
    %429 = vmatprep.subr.bf16.mxu0 0
    %430 = vmatpush1.bf16.msra.mxu0 0
    %431 = vmatprep.subr.bf16.mxu0 0
    %432 = vmatpush1.bf16.msra.mxu0 0
    %433 = vmatprep.subr.bf16.mxu0 0
    %434 = vmatpush1.bf16.msra.mxu0 0
    %435 = vmatprep.subr.bf16.mxu0 0
    %436 = vmatpush1.bf16.msra.mxu0 0
    %437 = vmatprep.subr.bf16.mxu0 0
    %438 = vmatpush1.bf16.msra.mxu0 0
    %439 = vmatprep.mubr.bf16.mxu0 0
    %440 = vmatmul.mubr.bf16.gmra.mrb[0].mxu0 %v405
    %v441 = vpop.f32.mrb[0].mxu0
    %v442 = vadd.f32 0.0, %v441
    %v443 = vpop.f32.mrb[0].mxu0
    %v444 = vpop.f32.mrb[0].mxu0
    %v445 = vpop.f32.mrb[0].mxu0
    %446 = vdwg.mxu0
    %v447 = vadd.f32 %v207, %v442
    %v448 = vxor.u32 %v447, 2147483648
    %v449 = vmul.f32 %v448, 1.442695
    %v450 = vpow.pop %v449
    %v451 = vadd.f32 %v450, 1.0
    %v452 = vrcp.pop %v451
    %v453 = vmul.f32 1.0, %v452
    %v454 = vmul.f32 %v453, 2.0
    %v455 = vsub.f32 %v454, 1.0
    %v456 = vmul.f32 %v453, %v388
    %458 = vrot.lane.b32.xlu0 %v455, 64
    %v459 = vpop.permute.xlu0 %458
    %v461 = vmul.f32 %v453, %v459
    %463 = vrot.lane.b32.xlu0 %v461, 32
    %v464 = vpop.permute.xlu0 %463
    %v466 = vadd.f32 %v456, %v464
    %v467 = vtanh.pop %v466
    %469 = vrot.lane.b32.xlu0 %v467, 64
    %v470 = vpop.permute.xlu0 %469
    %v472 = vmul.f32 %v453, %v470
    %v473 = vpack.c.bf16 %v472, %v472
    %475 = vrot.lane.b32.xlu0 %v472, 32
    %v476 = vpop.permute.xlu0 %475
    %478 = vst.msk [vmem:[#allocation2 + $0x10] sm:$0xff] %vm151, %v476
    %480 = vrot.lane.b32.xlu0 %v473, 32
    %v481 = vpop.permute.xlu0 %480
    %v483 = vsel %vm151, %v481, 0
    %485 = vmatprep.subr.bf16.mxu0 0
    %486 = vmatpush1.bf16.msra.mxu0 %v240
    %487 = vmatprep.subr.bf16.mxu0 0
    %488 = vmatpush1.bf16.msra.mxu0 %v241
    %489 = vmatprep.subr.bf16.mxu0 0
    %490 = vmatpush1.bf16.msra.mxu0 0
    %491 = vmatprep.subr.bf16.mxu0 0
    %492 = vmatpush1.bf16.msra.mxu0 0
    %493 = vmatprep.subr.bf16.mxu0 0
    %494 = vmatpush1.bf16.msra.mxu0 0
    %495 = vmatprep.subr.bf16.mxu0 0
    %496 = vmatpush1.bf16.msra.mxu0 0
    %497 = vmatprep.subr.bf16.mxu0 0
    %498 = vmatpush1.bf16.msra.mxu0 0
    %499 = vmatprep.subr.bf16.mxu0 0
    %500 = vmatpush1.bf16.msra.mxu0 0
    %501 = vmatprep.subr.bf16.mxu0 0
    %502 = vmatpush1.bf16.msra.mxu0 0
    %503 = vmatprep.subr.bf16.mxu0 0
    %504 = vmatpush1.bf16.msra.mxu0 0
    %505 = vmatprep.subr.bf16.mxu0 0
    %506 = vmatpush1.bf16.msra.mxu0 0
    %507 = vmatprep.subr.bf16.mxu0 0
    %508 = vmatpush1.bf16.msra.mxu0 0
    %509 = vmatprep.subr.bf16.mxu0 0
    %510 = vmatpush1.bf16.msra.mxu0 0
    %511 = vmatprep.subr.bf16.mxu0 0
    %512 = vmatpush1.bf16.msra.mxu0 0
    %513 = vmatprep.subr.bf16.mxu0 0
    %514 = vmatpush1.bf16.msra.mxu0 0
    %515 = vmatprep.subr.bf16.mxu0 0
    %516 = vmatpush1.bf16.msra.mxu0 0
    %517 = vmatprep.mubr.bf16.mxu0 0
    %518 = vmatmul.mubr.bf16.gmra.mrb[0].mxu0 %v483
    %v519 = vpop.f32.mrb[0].mxu0
    %v520 = vadd.f32 0.0, %v519
    %v521 = vpop.f32.mrb[0].mxu0
    %v522 = vpop.f32.mrb[0].mxu0
    %v523 = vpop.f32.mrb[0].mxu0
    %524 = vdwg.mxu0
    %v525 = vadd.f32 %v210, %v520
    %v526 = vxor.u32 %v525, 2147483648
    %v527 = vmul.f32 %v526, 1.442695
    %v528 = vpow.pop %v527
    %v529 = vadd.f32 %v528, 1.0
    %v530 = vrcp.pop %v529
    %v531 = vmul.f32 1.0, %v530
    %v532 = vmul.f32 %v531, 2.0
    %v533 = vsub.f32 %v532, 1.0
    %v534 = vmul.f32 %v531, %v466
    %536 = vrot.lane.b32.xlu0 %v533, 64
    %v537 = vpop.permute.xlu0 %536
    %v539 = vmul.f32 %v531, %v537
    %541 = vrot.lane.b32.xlu0 %v539, 32
    %v542 = vpop.permute.xlu0 %541
    %v544 = vadd.f32 %v534, %v542
    %v545 = vtanh.pop %v544
    %547 = vrot.lane.b32.xlu0 %v545, 64
    %v548 = vpop.permute.xlu0 %547
    %v550 = vmul.f32 %v531, %v548
    %v551 = vpack.c.bf16 %v550, %v550
    %553 = vrot.lane.b32.xlu0 %v550, 32
    %v554 = vpop.permute.xlu0 %553
    %556 = vst.msk [vmem:[#allocation2 + $0x18] sm:$0xff] %vm151, %v554
    %558 = vrot.lane.b32.xlu0 %v551, 32
    %v559 = vpop.permute.xlu0 %558
    %v561 = vsel %vm151, %v559, 0
    %563 = vmatprep.subr.bf16.mxu0 0
    %564 = vmatpush1.bf16.msra.mxu0 %v240
    %565 = vmatprep.subr.bf16.mxu0 0
    %566 = vmatpush1.bf16.msra.mxu0 %v241
    %567 = vmatprep.subr.bf16.mxu0 0
    %568 = vmatpush1.bf16.msra.mxu0 0
    %569 = vmatprep.subr.bf16.mxu0 0
    %570 = vmatpush1.bf16.msra.mxu0 0
    %571 = vmatprep.subr.bf16.mxu0 0
    %572 = vmatpush1.bf16.msra.mxu0 0
    %573 = vmatprep.subr.bf16.mxu0 0
    %574 = vmatpush1.bf16.msra.mxu0 0
    %575 = vmatprep.subr.bf16.mxu0 0
    %576 = vmatpush1.bf16.msra.mxu0 0
    %577 = vmatprep.subr.bf16.mxu0 0
    %578 = vmatpush1.bf16.msra.mxu0 0
    %579 = vmatprep.subr.bf16.mxu0 0
    %580 = vmatpush1.bf16.msra.mxu0 0
    %581 = vmatprep.subr.bf16.mxu0 0
    %582 = vmatpush1.bf16.msra.mxu0 0
    %583 = vmatprep.subr.bf16.mxu0 0
    %584 = vmatpush1.bf16.msra.mxu0 0
    %585 = vmatprep.subr.bf16.mxu0 0
    %586 = vmatpush1.bf16.msra.mxu0 0
    %587 = vmatprep.subr.bf16.mxu0 0
    %588 = vmatpush1.bf16.msra.mxu0 0
    %589 = vmatprep.subr.bf16.mxu0 0
    %590 = vmatpush1.bf16.msra.mxu0 0
    %591 = vmatprep.subr.bf16.mxu0 0
    %592 = vmatpush1.bf16.msra.mxu0 0
    %593 = vmatprep.subr.bf16.mxu0 0
    %594 = vmatpush1.bf16.msra.mxu0 0
    %595 = vmatprep.mubr.bf16.mxu0 0
    %596 = vmatmul.mubr.bf16.gmra.mrb[0].mxu0 %v561
    %v597 = vpop.f32.mrb[0].mxu0
    %v598 = vadd.f32 0.0, %v597
    %v599 = vpop.f32.mrb[0].mxu0
    %v600 = vpop.f32.mrb[0].mxu0
    %v601 = vpop.f32.mrb[0].mxu0
    %602 = vdwg.mxu0
    %v603 = vadd.f32 %v215, %v598
    %v604 = vxor.u32 %v603, 2147483648
    %v605 = vmul.f32 %v604, 1.442695
    %v606 = vpow.pop %v605
    %v607 = vadd.f32 %v606, 1.0
    %v608 = vrcp.pop %v607
    %v609 = vmul.f32 1.0, %v608
    %v610 = vmul.f32 %v609, 2.0
    %v611 = vsub.f32 %v610, 1.0
    %v612 = vmul.f32 %v609, %v544
    %614 = vrot.lane.b32.xlu0 %v611, 64
    %v615 = vpop.permute.xlu0 %614
    %v617 = vmul.f32 %v609, %v615
    %619 = vrot.lane.b32.xlu0 %v617, 32
    %v620 = vpop.permute.xlu0 %619
    %v622 = vadd.f32 %v612, %v620
    %v623 = vtanh.pop %v622
    %625 = vrot.lane.b32.xlu0 %v623, 64
    %v626 = vpop.permute.xlu0 %625
    %v628 = vmul.f32 %v609, %v626
    %v629 = vpack.c.bf16 %v628, %v628
    %631 = vrot.lane.b32.xlu0 %v628, 32
    %v632 = vpop.permute.xlu0 %631
    %634 = vst.msk [vmem:[#allocation2 + $0x20] sm:$0xff] %vm151, %v632
    %636 = vrot.lane.b32.xlu0 %v629, 32
    %v637 = vpop.permute.xlu0 %636
    %v639 = vsel %vm151, %v637, 0
    %641 = vmatprep.subr.bf16.mxu0 0
    %642 = vmatpush1.bf16.msra.mxu0 %v240
    %643 = vmatprep.subr.bf16.mxu0 0
    %644 = vmatpush1.bf16.msra.mxu0 %v241
    %645 = vmatprep.subr.bf16.mxu0 0
    %646 = vmatpush1.bf16.msra.mxu0 0
    %647 = vmatprep.subr.bf16.mxu0 0
    %648 = vmatpush1.bf16.msra.mxu0 0
    %649 = vmatprep.subr.bf16.mxu0 0
    %650 = vmatpush1.bf16.msra.mxu0 0
    %651 = vmatprep.subr.bf16.mxu0 0
    %652 = vmatpush1.bf16.msra.mxu0 0
    %653 = vmatprep.subr.bf16.mxu0 0
    %654 = vmatpush1.bf16.msra.mxu0 0
    %655 = vmatprep.subr.bf16.mxu0 0
    %656 = vmatpush1.bf16.msra.mxu0 0
    %657 = vmatprep.subr.bf16.mxu0 0
    %658 = vmatpush1.bf16.msra.mxu0 0
    %659 = vmatprep.subr.bf16.mxu0 0
    %660 = vmatpush1.bf16.msra.mxu0 0
    %661 = vmatprep.subr.bf16.mxu0 0
    %662 = vmatpush1.bf16.msra.mxu0 0
    %663 = vmatprep.subr.bf16.mxu0 0
    %664 = vmatpush1.bf16.msra.mxu0 0
    %665 = vmatprep.subr.bf16.mxu0 0
    %666 = vmatpush1.bf16.msra.mxu0 0
    %667 = vmatprep.subr.bf16.mxu0 0
    %668 = vmatpush1.bf16.msra.mxu0 0
    %669 = vmatprep.subr.bf16.mxu0 0
    %670 = vmatpush1.bf16.msra.mxu0 0
    %671 = vmatprep.subr.bf16.mxu0 0
    %672 = vmatpush1.bf16.msra.mxu0 0
    %673 = vmatprep.mubr.bf16.mxu0 0
    %674 = vmatmul.mubr.bf16.gmra.mrb[0].mxu0 %v639
    %v675 = vpop.f32.mrb[0].mxu0
    %v676 = vadd.f32 0.0, %v675
    %v677 = vpop.f32.mrb[0].mxu0
    %v678 = vpop.f32.mrb[0].mxu0
    %v679 = vpop.f32.mrb[0].mxu0
    %680 = vdwg.mxu0
    %v681 = vadd.f32 %v218, %v676
    %v682 = vxor.u32 %v681, 2147483648
    %v683 = vmul.f32 %v682, 1.442695
    %v684 = vpow.pop %v683
    %v685 = vadd.f32 %v684, 1.0
    %v686 = vrcp.pop %v685
    %v687 = vmul.f32 1.0, %v686
    %v688 = vmul.f32 %v687, 2.0
    %v689 = vsub.f32 %v688, 1.0
    %v690 = vmul.f32 %v687, %v622
    %692 = vrot.lane.b32.xlu0 %v689, 64
    %v693 = vpop.permute.xlu0 %692
    %v695 = vmul.f32 %v687, %v693
    %697 = vrot.lane.b32.xlu0 %v695, 32
    %v698 = vpop.permute.xlu0 %697
    %v700 = vadd.f32 %v690, %v698
    %v701 = vtanh.pop %v700
    %703 = vrot.lane.b32.xlu0 %v701, 64
    %v704 = vpop.permute.xlu0 %703
    %v706 = vmul.f32 %v687, %v704
    %v707 = vpack.c.bf16 %v706, %v706
    %709 = vrot.lane.b32.xlu0 %v706, 32
    %v710 = vpop.permute.xlu0 %709
    %712 = vst.msk [vmem:[#allocation2 + $0x28] sm:$0xff] %vm151, %v710
    %714 = vrot.lane.b32.xlu0 %v707, 32
    %v715 = vpop.permute.xlu0 %714
    %v717 = vsel %vm151, %v715, 0
    %719 = vmatprep.subr.bf16.mxu0 0
    %720 = vmatpush1.bf16.msra.mxu0 %v240
    %721 = vmatprep.subr.bf16.mxu0 0
    %722 = vmatpush1.bf16.msra.mxu0 %v241
    %723 = vmatprep.subr.bf16.mxu0 0
    %724 = vmatpush1.bf16.msra.mxu0 0
    %725 = vmatprep.subr.bf16.mxu0 0
    %726 = vmatpush1.bf16.msra.mxu0 0
    %727 = vmatprep.subr.bf16.mxu0 0
    %728 = vmatpush1.bf16.msra.mxu0 0
    %729 = vmatprep.subr.bf16.mxu0 0
    %730 = vmatpush1.bf16.msra.mxu0 0
    %731 = vmatprep.subr.bf16.mxu0 0
    %732 = vmatpush1.bf16.msra.mxu0 0
    %733 = vmatprep.subr.bf16.mxu0 0
    %734 = vmatpush1.bf16.msra.mxu0 0
    %735 = vmatprep.subr.bf16.mxu0 0
    %736 = vmatpush1.bf16.msra.mxu0 0
    %737 = vmatprep.subr.bf16.mxu0 0
    %738 = vmatpush1.bf16.msra.mxu0 0
    %739 = vmatprep.subr.bf16.mxu0 0
    %740 = vmatpush1.bf16.msra.mxu0 0
    %741 = vmatprep.subr.bf16.mxu0 0
    %742 = vmatpush1.bf16.msra.mxu0 0
    %743 = vmatprep.subr.bf16.mxu0 0
    %744 = vmatpush1.bf16.msra.mxu0 0
    %745 = vmatprep.subr.bf16.mxu0 0
    %746 = vmatpush1.bf16.msra.mxu0 0
    %747 = vmatprep.subr.bf16.mxu0 0
    %748 = vmatpush1.bf16.msra.mxu0 0
    %749 = vmatprep.subr.bf16.mxu0 0
    %750 = vmatpush1.bf16.msra.mxu0 0
    %751 = vmatprep.mubr.bf16.mxu0 0
    %752 = vmatmul.mubr.bf16.gmra.mrb[0].mxu0 %v717
    %v753 = vpop.f32.mrb[0].mxu0
    %v754 = vadd.f32 0.0, %v753
    %v755 = vpop.f32.mrb[0].mxu0
    %v756 = vpop.f32.mrb[0].mxu0
    %v757 = vpop.f32.mrb[0].mxu0
    %758 = vdwg.mxu0
    %v759 = vadd.f32 %v223, %v754
    %v760 = vxor.u32 %v759, 2147483648
    %v761 = vmul.f32 %v760, 1.442695
    %v762 = vpow.pop %v761
    %v763 = vadd.f32 %v762, 1.0
    %v764 = vrcp.pop %v763
    %v765 = vmul.f32 1.0, %v764
    %v766 = vmul.f32 %v765, 2.0
    %v767 = vsub.f32 %v766, 1.0
    %v768 = vmul.f32 %v765, %v700
    %770 = vrot.lane.b32.xlu0 %v767, 64
    %v771 = vpop.permute.xlu0 %770
    %v773 = vmul.f32 %v765, %v771
    %775 = vrot.lane.b32.xlu0 %v773, 32
    %v776 = vpop.permute.xlu0 %775
    %v778 = vadd.f32 %v768, %v776
    %v779 = vtanh.pop %v778
    %781 = vrot.lane.b32.xlu0 %v779, 64
    %v782 = vpop.permute.xlu0 %781
    %v784 = vmul.f32 %v765, %v782
    %v785 = vpack.c.bf16 %v784, %v784
    %787 = vrot.lane.b32.xlu0 %v784, 32
    %v788 = vpop.permute.xlu0 %787
    %790 = vst.msk [vmem:[#allocation2 + $0x30] sm:$0xff] %vm151, %v788
    %792 = vrot.lane.b32.xlu0 %v785, 32
    %v793 = vpop.permute.xlu0 %792
    %v795 = vsel %vm151, %v793, 0
    %797 = vmatprep.subr.bf16.mxu0 0
    %798 = vmatpush1.bf16.msra.mxu0 %v240
    %799 = vmatprep.subr.bf16.mxu0 0
    %800 = vmatpush1.bf16.msra.mxu0 %v241
    %801 = vmatprep.subr.bf16.mxu0 0
    %802 = vmatpush1.bf16.msra.mxu0 0
    %803 = vmatprep.subr.bf16.mxu0 0
    %804 = vmatpush1.bf16.msra.mxu0 0
    %805 = vmatprep.subr.bf16.mxu0 0
    %806 = vmatpush1.bf16.msra.mxu0 0
    %807 = vmatprep.subr.bf16.mxu0 0
    %808 = vmatpush1.bf16.msra.mxu0 0
    %809 = vmatprep.subr.bf16.mxu0 0
    %810 = vmatpush1.bf16.msra.mxu0 0
    %811 = vmatprep.subr.bf16.mxu0 0
    %812 = vmatpush1.bf16.msra.mxu0 0
    %813 = vmatprep.subr.bf16.mxu0 0
    %814 = vmatpush1.bf16.msra.mxu0 0
    %815 = vmatprep.subr.bf16.mxu0 0
    %816 = vmatpush1.bf16.msra.mxu0 0
    %817 = vmatprep.subr.bf16.mxu0 0
    %818 = vmatpush1.bf16.msra.mxu0 0
    %819 = vmatprep.subr.bf16.mxu0 0
    %820 = vmatpush1.bf16.msra.mxu0 0
    %821 = vmatprep.subr.bf16.mxu0 0
    %822 = vmatpush1.bf16.msra.mxu0 0
    %823 = vmatprep.subr.bf16.mxu0 0
    %824 = vmatpush1.bf16.msra.mxu0 0
    %825 = vmatprep.subr.bf16.mxu0 0
    %826 = vmatpush1.bf16.msra.mxu0 0
    %827 = vmatprep.subr.bf16.mxu0 0
    %828 = vmatpush1.bf16.msra.mxu0 0
    %829 = vmatprep.mubr.bf16.mxu0 0
    %830 = vmatmul.mubr.bf16.gmra.mrb[0].mxu0 %v795
    %v831 = vpop.f32.mrb[0].mxu0
    %v832 = vadd.f32 0.0, %v831
    %v833 = vpop.f32.mrb[0].mxu0
    %v834 = vpop.f32.mrb[0].mxu0
    %v835 = vpop.f32.mrb[0].mxu0
    %836 = vdwg.mxu0
    %v837 = vadd.f32 %v226, %v832
    %v838 = vxor.u32 %v837, 2147483648
    %v839 = vmul.f32 %v838, 1.442695
    %v840 = vpow.pop %v839
    %v841 = vadd.f32 %v840, 1.0
    %v842 = vrcp.pop %v841
    %v843 = vmul.f32 1.0, %v842
    %v844 = vmul.f32 %v843, 2.0
    %v845 = vsub.f32 %v844, 1.0
    %v846 = vmul.f32 %v843, %v778
    %848 = vrot.lane.b32.xlu0 %v845, 64
    %v849 = vpop.permute.xlu0 %848
    %v851 = vmul.f32 %v843, %v849
    %853 = vrot.lane.b32.xlu0 %v851, 32
    %v854 = vpop.permute.xlu0 %853
    %v856 = vadd.f32 %v846, %v854
    %v857 = vtanh.pop %v856
    %859 = vrot.lane.b32.xlu0 %v857, 64
    %v860 = vpop.permute.xlu0 %859
    %v862 = vmul.f32 %v843, %v860
    %864 = vrot.lane.b32.xlu0 %v862, 32
    %v865 = vpop.permute.xlu0 %864
    %867 = vst.msk [vmem:[#allocation2 + $0x38] sm:$0xff] %vm151, %v865
    %v868 = vld [vmem:[%s4] sm:$0xf]
    %v869 = vld [vmem:[%s4 + $0x4] sm:$0xf]
    %v870 = vld [vmem:[%s4 + $0x8] sm:$0xf]
    %v871 = vld [vmem:[%s4 + $0xc] sm:$0xf]
    %v872 = vld [vmem:[%s5] sm:$0x1]
    %v873 = vld [vmem:[%s6] sm:$0xf]
    %v874 = vld [vmem:[%s6 + $0x4] sm:$0xf]
    %v875 = vld [vmem:[%s6 + $0x8] sm:$0xf]
    %v876 = vld [vmem:[%s6 + $0xc] sm:$0xf]
    %v877 = vld [vmem:[#allocation2] sm:$0xff]
    %v878 = vld [vmem:[#allocation2 + $0x8] sm:$0xff]
    %v879 = vld [vmem:[#allocation2 + $0x10] sm:$0xff]
    %v880 = vld [vmem:[#allocation2 + $0x18] sm:$0xff]
    %v881 = vld [vmem:[#allocation2 + $0x20] sm:$0xff]
    %v882 = vld [vmem:[#allocation2 + $0x28] sm:$0xff]
    %v883 = vld [vmem:[#allocation2 + $0x30] sm:$0xff]
    %v884 = vld [vmem:[#allocation2 + $0x38] sm:$0xff]
    %v885 = vpack.c.bf16 %v878, %v877
    %v886 = vpack.c.bf16 %v880, %v879
    %v887 = vpack.c.bf16 %v882, %v881
    %v888 = vpack.c.bf16 %v884, %v883
    %v890 = vlaneseq
    %v891 = vshrl.u32 %v890, 7
    %v892 = vsub.s32 0, %v891
    %v893 = vrot.slane %v872, %v892
    %v899 = vunpack.c.l.b16 %v868
    %v900 = vunpack.c.l.b16 %v869
    %v901 = vunpack.c.l.b16 %v870
    %v902 = vunpack.c.l.b16 %v871
    %v903 = vpack.c.b16 %v900, %v899
    %v904 = vpack.c.b16 %v902, %v901
    %v908 = vsel %vm151, %v885, 0
    %v911 = vsel %vm151, %v886, 0
    %v914 = vsel %vm151, %v887, 0
    %v917 = vsel %vm151, %v888, 0
    %919 = vmatprep.subr.bf16.mxu0 0
    %920 = vmatpush1.bf16.msra.mxu0 %v903
    %921 = vmatprep.subr.bf16.mxu0 0
    %922 = vmatpush1.bf16.msra.mxu0 %v904
    %923 = vmatprep.subr.bf16.mxu0 0
    %924 = vmatpush1.bf16.msra.mxu0 0
    %925 = vmatprep.subr.bf16.mxu0 0
    %926 = vmatpush1.bf16.msra.mxu0 0
    %927 = vmatprep.subr.bf16.mxu0 0
    %928 = vmatpush1.bf16.msra.mxu0 0
    %929 = vmatprep.subr.bf16.mxu0 0
    %930 = vmatpush1.bf16.msra.mxu0 0
    %931 = vmatprep.subr.bf16.mxu0 0
    %932 = vmatpush1.bf16.msra.mxu0 0
    %933 = vmatprep.subr.bf16.mxu0 0
    %934 = vmatpush1.bf16.msra.mxu0 0
    %935 = vmatprep.subr.bf16.mxu0 0
    %936 = vmatpush1.bf16.msra.mxu0 0
    %937 = vmatprep.subr.bf16.mxu0 0
    %938 = vmatpush1.bf16.msra.mxu0 0
    %939 = vmatprep.subr.bf16.mxu0 0
    %940 = vmatpush1.bf16.msra.mxu0 0
    %941 = vmatprep.subr.bf16.mxu0 0
    %942 = vmatpush1.bf16.msra.mxu0 0
    %943 = vmatprep.subr.bf16.mxu0 0
    %944 = vmatpush1.bf16.msra.mxu0 0
    %945 = vmatprep.subr.bf16.mxu0 0
    %946 = vmatpush1.bf16.msra.mxu0 0
    %947 = vmatprep.subr.bf16.mxu0 0
    %948 = vmatpush1.bf16.msra.mxu0 0
    %949 = vmatprep.subr.bf16.mxu0 0
    %950 = vmatpush1.bf16.msra.mxu0 0
    %951 = vmatprep.mubr.bf16.mxu0 0
    %952 = vmatmul.mubr.bf16.gmra.mrb[0].mxu0 %v908
    %v953 = vpop.f32.mrb[0].mxu0
    %v954 = vadd.f32 %v893, %v953
    %v955 = vpop.f32.mrb[0].mxu0
    %v956 = vpop.f32.mrb[0].mxu0
    %v957 = vadd.f32 %v893, %v956
    %v958 = vpop.f32.mrb[0].mxu0
    %959 = vmatprep.mubr.bf16.mxu0 0
    %960 = vmatmul.mubr.bf16.gmra.mrb[0].mxu0 %v911
    %v961 = vpop.f32.mrb[0].mxu0
    %v962 = vadd.f32 %v893, %v961
    %v963 = vpop.f32.mrb[0].mxu0
    %v964 = vpop.f32.mrb[0].mxu0
    %v965 = vadd.f32 %v893, %v964
    %v966 = vpop.f32.mrb[0].mxu0
    %967 = vmatprep.mubr.bf16.mxu0 0
    %968 = vmatmul.mubr.bf16.gmra.mrb[0].mxu0 %v914
    %v969 = vpop.f32.mrb[0].mxu0
    %v970 = vadd.f32 %v893, %v969
    %v971 = vpop.f32.mrb[0].mxu0
    %v972 = vpop.f32.mrb[0].mxu0
    %v973 = vadd.f32 %v893, %v972
    %v974 = vpop.f32.mrb[0].mxu0
    %975 = vmatprep.mubr.bf16.mxu0 0
    %976 = vmatmul.mubr.bf16.gmra.mrb[0].mxu0 %v917
    %v977 = vpop.f32.mrb[0].mxu0
    %v978 = vadd.f32 %v893, %v977
    %v979 = vpop.f32.mrb[0].mxu0
    %v980 = vpop.f32.mrb[0].mxu0
    %v981 = vadd.f32 %v893, %v980
    %v982 = vpop.f32.mrb[0].mxu0
    %983 = vdwg.mxu0
    %s984 = scalar_lea.vmem %s9, 8
    %v985 = vld [vmem:[%s984] sm:$0xff]
    %s986 = scalar_lea.vmem [#allocation6], 8
    %v987 = vld [vmem:[%s986] sm:$0xff]
    %v988 = vpack.c.bf16 %v985, %v985
    %v993 = vunpack.c.l.b16 %v873
    %v994 = vunpack.c.l.b16 %v874
    %v995 = vunpack.c.l.b16 %v875
    %v996 = vunpack.c.l.b16 %v876
    %v997 = vpack.c.b16 %v994, %v993
    %v998 = vpack.c.b16 %v996, %v995
    %v1002 = vsel %vm151, %v988, 0
    %1004 = vmatprep.subr.bf16.mxu0 0
    %1005 = vmatpush1.bf16.msra.mxu0 %v997
    %1006 = vmatprep.subr.bf16.mxu0 0
    %1007 = vmatpush1.bf16.msra.mxu0 %v998
    %1008 = vmatprep.subr.bf16.mxu0 0
    %1009 = vmatpush1.bf16.msra.mxu0 0
    %1010 = vmatprep.subr.bf16.mxu0 0
    %1011 = vmatpush1.bf16.msra.mxu0 0
    %1012 = vmatprep.subr.bf16.mxu0 0
    %1013 = vmatpush1.bf16.msra.mxu0 0
    %1014 = vmatprep.subr.bf16.mxu0 0
    %1015 = vmatpush1.bf16.msra.mxu0 0
    %1016 = vmatprep.subr.bf16.mxu0 0
    %1017 = vmatpush1.bf16.msra.mxu0 0
    %1018 = vmatprep.subr.bf16.mxu0 0
    %1019 = vmatpush1.bf16.msra.mxu0 0
    %1020 = vmatprep.subr.bf16.mxu0 0
    %1021 = vmatpush1.bf16.msra.mxu0 0
    %1022 = vmatprep.subr.bf16.mxu0 0
    %1023 = vmatpush1.bf16.msra.mxu0 0
    %1024 = vmatprep.subr.bf16.mxu0 0
    %1025 = vmatpush1.bf16.msra.mxu0 0
    %1026 = vmatprep.subr.bf16.mxu0 0
    %1027 = vmatpush1.bf16.msra.mxu0 0
    %1028 = vmatprep.subr.bf16.mxu0 0
    %1029 = vmatpush1.bf16.msra.mxu0 0
    %1030 = vmatprep.subr.bf16.mxu0 0
    %1031 = vmatpush1.bf16.msra.mxu0 0
    %1032 = vmatprep.subr.bf16.mxu0 0
    %1033 = vmatpush1.bf16.msra.mxu0 0
    %1034 = vmatprep.subr.bf16.mxu0 0
    %1035 = vmatpush1.bf16.msra.mxu0 0
    %1036 = vmatprep.mubr.bf16.mxu0 0
    %1037 = vmatmul.mubr.bf16.gmra.mrb[0].mxu0 %v1002
    %v1038 = vpop.f32.mrb[0].mxu0
    %v1039 = vadd.f32 0.0, %v1038
    %v1040 = vpop.f32.mrb[0].mxu0
    %v1041 = vpop.f32.mrb[0].mxu0
    %v1042 = vpop.f32.mrb[0].mxu0
    %1043 = vdwg.mxu0
    %v1044 = vadd.f32 %v954, %v1039
    %v1045 = vxor.u32 %v1044, 2147483648
    %v1046 = vmul.f32 %v1045, 1.442695
    %v1047 = vpow.pop %v1046
    %v1048 = vadd.f32 %v1047, 1.0
    %v1049 = vrcp.pop %v1048
    %v1050 = vmul.f32 1.0, %v1049
    %v1051 = vmul.f32 %v1050, 2.0
    %v1052 = vsub.f32 %v1051, 1.0
    %1054 = vrot.lane.b32.xlu0 %v987, 32
    %v1055 = vpop.permute.xlu0 %1054
    %v1057 = vmul.f32 %v1050, %v1055
    %1059 = vrot.lane.b32.xlu0 %v1052, 64
    %v1060 = vpop.permute.xlu0 %1059
    %v1062 = vmul.f32 %v1050, %v1060
    %1064 = vrot.lane.b32.xlu0 %v1062, 32
    %v1065 = vpop.permute.xlu0 %1064
    %v1067 = vadd.f32 %v1057, %v1065
    %v1068 = vtanh.pop %v1067
    %1070 = vrot.lane.b32.xlu0 %v1068, 64
    %v1071 = vpop.permute.xlu0 %1070
    %v1073 = vmul.f32 %v1050, %v1071
    %v1074 = vpack.c.bf16 %v1073, %v1073
    %1076 = vrot.lane.b32.xlu0 %v1073, 32
    %v1077 = vpop.permute.xlu0 %1076
    %1079 = vst.msk [vmem:[#allocation2] sm:$0xff] %vm151, %v1077
    %1081 = vrot.lane.b32.xlu0 %v1074, 32
    %v1082 = vpop.permute.xlu0 %1081
    %v1084 = vsel %vm151, %v1082, 0
    %1086 = vmatprep.subr.bf16.mxu0 0
    %1087 = vmatpush1.bf16.msra.mxu0 %v997
    %1088 = vmatprep.subr.bf16.mxu0 0
    %1089 = vmatpush1.bf16.msra.mxu0 %v998
    %1090 = vmatprep.subr.bf16.mxu0 0
    %1091 = vmatpush1.bf16.msra.mxu0 0
    %1092 = vmatprep.subr.bf16.mxu0 0
    %1093 = vmatpush1.bf16.msra.mxu0 0
    %1094 = vmatprep.subr.bf16.mxu0 0
    %1095 = vmatpush1.bf16.msra.mxu0 0
    %1096 = vmatprep.subr.bf16.mxu0 0
    %1097 = vmatpush1.bf16.msra.mxu0 0
    %1098 = vmatprep.subr.bf16.mxu0 0
    %1099 = vmatpush1.bf16.msra.mxu0 0
    %1100 = vmatprep.subr.bf16.mxu0 0
    %1101 = vmatpush1.bf16.msra.mxu0 0
    %1102 = vmatprep.subr.bf16.mxu0 0
    %1103 = vmatpush1.bf16.msra.mxu0 0
    %1104 = vmatprep.subr.bf16.mxu0 0
    %1105 = vmatpush1.bf16.msra.mxu0 0
    %1106 = vmatprep.subr.bf16.mxu0 0
    %1107 = vmatpush1.bf16.msra.mxu0 0
    %1108 = vmatprep.subr.bf16.mxu0 0
    %1109 = vmatpush1.bf16.msra.mxu0 0
    %1110 = vmatprep.subr.bf16.mxu0 0
    %1111 = vmatpush1.bf16.msra.mxu0 0
    %1112 = vmatprep.subr.bf16.mxu0 0
    %1113 = vmatpush1.bf16.msra.mxu0 0
    %1114 = vmatprep.subr.bf16.mxu0 0
    %1115 = vmatpush1.bf16.msra.mxu0 0
    %1116 = vmatprep.subr.bf16.mxu0 0
    %1117 = vmatpush1.bf16.msra.mxu0 0
    %1118 = vmatprep.mubr.bf16.mxu0 0
    %1119 = vmatmul.mubr.bf16.gmra.mrb[0].mxu0 %v1084
    %v1120 = vpop.f32.mrb[0].mxu0
    %v1121 = vadd.f32 0.0, %v1120
    %v1122 = vpop.f32.mrb[0].mxu0
    %v1123 = vpop.f32.mrb[0].mxu0
    %v1124 = vpop.f32.mrb[0].mxu0
    %1125 = vdwg.mxu0
    %v1126 = vadd.f32 %v957, %v1121
    %v1127 = vxor.u32 %v1126, 2147483648
    %v1128 = vmul.f32 %v1127, 1.442695
    %v1129 = vpow.pop %v1128
    %v1130 = vadd.f32 %v1129, 1.0
    %v1131 = vrcp.pop %v1130
    %v1132 = vmul.f32 1.0, %v1131
    %v1133 = vmul.f32 %v1132, 2.0
    %v1134 = vsub.f32 %v1133, 1.0
    %v1135 = vmul.f32 %v1132, %v1067
    %1137 = vrot.lane.b32.xlu0 %v1134, 64
    %v1138 = vpop.permute.xlu0 %1137
    %v1140 = vmul.f32 %v1132, %v1138
    %1142 = vrot.lane.b32.xlu0 %v1140, 32
    %v1143 = vpop.permute.xlu0 %1142
    %v1145 = vadd.f32 %v1135, %v1143
    %v1146 = vtanh.pop %v1145
    %1148 = vrot.lane.b32.xlu0 %v1146, 64
    %v1149 = vpop.permute.xlu0 %1148
    %v1151 = vmul.f32 %v1132, %v1149
    %v1152 = vpack.c.bf16 %v1151, %v1151
    %1154 = vrot.lane.b32.xlu0 %v1151, 32
    %v1155 = vpop.permute.xlu0 %1154
    %1157 = vst.msk [vmem:[#allocation2 + $0x8] sm:$0xff] %vm151, %v1155
    %1159 = vrot.lane.b32.xlu0 %v1152, 32
    %v1160 = vpop.permute.xlu0 %1159
    %v1162 = vsel %vm151, %v1160, 0
    %1164 = vmatprep.subr.bf16.mxu0 0
    %1165 = vmatpush1.bf16.msra.mxu0 %v997
    %1166 = vmatprep.subr.bf16.mxu0 0
    %1167 = vmatpush1.bf16.msra.mxu0 %v998
    %1168 = vmatprep.subr.bf16.mxu0 0
    %1169 = vmatpush1.bf16.msra.mxu0 0
    %1170 = vmatprep.subr.bf16.mxu0 0
    %1171 = vmatpush1.bf16.msra.mxu0 0
    %1172 = vmatprep.subr.bf16.mxu0 0
    %1173 = vmatpush1.bf16.msra.mxu0 0
    %1174 = vmatprep.subr.bf16.mxu0 0
    %1175 = vmatpush1.bf16.msra.mxu0 0
    %1176 = vmatprep.subr.bf16.mxu0 0
    %1177 = vmatpush1.bf16.msra.mxu0 0
    %1178 = vmatprep.subr.bf16.mxu0 0
    %1179 = vmatpush1.bf16.msra.mxu0 0
    %1180 = vmatprep.subr.bf16.mxu0 0
    %1181 = vmatpush1.bf16.msra.mxu0 0
    %1182 = vmatprep.subr.bf16.mxu0 0
    %1183 = vmatpush1.bf16.msra.mxu0 0
    %1184 = vmatprep.subr.bf16.mxu0 0
    %1185 = vmatpush1.bf16.msra.mxu0 0
    %1186 = vmatprep.subr.bf16.mxu0 0
    %1187 = vmatpush1.bf16.msra.mxu0 0
    %1188 = vmatprep.subr.bf16.mxu0 0
    %1189 = vmatpush1.bf16.msra.mxu0 0
    %1190 = vmatprep.subr.bf16.mxu0 0
    %1191 = vmatpush1.bf16.msra.mxu0 0
    %1192 = vmatprep.subr.bf16.mxu0 0
    %1193 = vmatpush1.bf16.msra.mxu0 0
    %1194 = vmatprep.subr.bf16.mxu0 0
    %1195 = vmatpush1.bf16.msra.mxu0 0
    %1196 = vmatprep.mubr.bf16.mxu0 0
    %1197 = vmatmul.mubr.bf16.gmra.mrb[0].mxu0 %v1162
    %v1198 = vpop.f32.mrb[0].mxu0
    %v1199 = vadd.f32 0.0, %v1198
    %v1200 = vpop.f32.mrb[0].mxu0
    %v1201 = vpop.f32.mrb[0].mxu0
    %v1202 = vpop.f32.mrb[0].mxu0
    %1203 = vdwg.mxu0
    %v1204 = vadd.f32 %v962, %v1199
    %v1205 = vxor.u32 %v1204, 2147483648
    %v1206 = vmul.f32 %v1205, 1.442695
    %v1207 = vpow.pop %v1206
    %v1208 = vadd.f32 %v1207, 1.0
    %v1209 = vrcp.pop %v1208
    %v1210 = vmul.f32 1.0, %v1209
    %v1211 = vmul.f32 %v1210, 2.0
    %v1212 = vsub.f32 %v1211, 1.0
    %v1213 = vmul.f32 %v1210, %v1145
    %1215 = vrot.lane.b32.xlu0 %v1212, 64
    %v1216 = vpop.permute.xlu0 %1215
    %v1218 = vmul.f32 %v1210, %v1216
    %1220 = vrot.lane.b32.xlu0 %v1218, 32
    %v1221 = vpop.permute.xlu0 %1220
    %v1223 = vadd.f32 %v1213, %v1221
    %v1224 = vtanh.pop %v1223
    %1226 = vrot.lane.b32.xlu0 %v1224, 64
    %v1227 = vpop.permute.xlu0 %1226
    %v1229 = vmul.f32 %v1210, %v1227
    %v1230 = vpack.c.bf16 %v1229, %v1229
    %1232 = vrot.lane.b32.xlu0 %v1229, 32
    %v1233 = vpop.permute.xlu0 %1232
    %1235 = vst.msk [vmem:[#allocation2 + $0x10] sm:$0xff] %vm151, %v1233
    %1237 = vrot.lane.b32.xlu0 %v1230, 32
    %v1238 = vpop.permute.xlu0 %1237
    %v1240 = vsel %vm151, %v1238, 0
    %1242 = vmatprep.subr.bf16.mxu0 0
    %1243 = vmatpush1.bf16.msra.mxu0 %v997
    %1244 = vmatprep.subr.bf16.mxu0 0
    %1245 = vmatpush1.bf16.msra.mxu0 %v998
    %1246 = vmatprep.subr.bf16.mxu0 0
    %1247 = vmatpush1.bf16.msra.mxu0 0
    %1248 = vmatprep.subr.bf16.mxu0 0
    %1249 = vmatpush1.bf16.msra.mxu0 0
    %1250 = vmatprep.subr.bf16.mxu0 0
    %1251 = vmatpush1.bf16.msra.mxu0 0
    %1252 = vmatprep.subr.bf16.mxu0 0
    %1253 = vmatpush1.bf16.msra.mxu0 0
    %1254 = vmatprep.subr.bf16.mxu0 0
    %1255 = vmatpush1.bf16.msra.mxu0 0
    %1256 = vmatprep.subr.bf16.mxu0 0
    %1257 = vmatpush1.bf16.msra.mxu0 0
    %1258 = vmatprep.subr.bf16.mxu0 0
    %1259 = vmatpush1.bf16.msra.mxu0 0
    %1260 = vmatprep.subr.bf16.mxu0 0
    %1261 = vmatpush1.bf16.msra.mxu0 0
    %1262 = vmatprep.subr.bf16.mxu0 0
    %1263 = vmatpush1.bf16.msra.mxu0 0
    %1264 = vmatprep.subr.bf16.mxu0 0
    %1265 = vmatpush1.bf16.msra.mxu0 0
    %1266 = vmatprep.subr.bf16.mxu0 0
    %1267 = vmatpush1.bf16.msra.mxu0 0
    %1268 = vmatprep.subr.bf16.mxu0 0
    %1269 = vmatpush1.bf16.msra.mxu0 0
    %1270 = vmatprep.subr.bf16.mxu0 0
    %1271 = vmatpush1.bf16.msra.mxu0 0
    %1272 = vmatprep.subr.bf16.mxu0 0
    %1273 = vmatpush1.bf16.msra.mxu0 0
    %1274 = vmatprep.mubr.bf16.mxu0 0
    %1275 = vmatmul.mubr.bf16.gmra.mrb[0].mxu0 %v1240
    %v1276 = vpop.f32.mrb[0].mxu0
    %v1277 = vadd.f32 0.0, %v1276
    %v1278 = vpop.f32.mrb[0].mxu0
    %v1279 = vpop.f32.mrb[0].mxu0
    %v1280 = vpop.f32.mrb[0].mxu0
    %1281 = vdwg.mxu0
    %v1282 = vadd.f32 %v965, %v1277
    %v1283 = vxor.u32 %v1282, 2147483648
    %v1284 = vmul.f32 %v1283, 1.442695
    %v1285 = vpow.pop %v1284
    %v1286 = vadd.f32 %v1285, 1.0
    %v1287 = vrcp.pop %v1286
    %v1288 = vmul.f32 1.0, %v1287
    %v1289 = vmul.f32 %v1288, 2.0
    %v1290 = vsub.f32 %v1289, 1.0
    %v1291 = vmul.f32 %v1288, %v1223
    %1293 = vrot.lane.b32.xlu0 %v1290, 64
    %v1294 = vpop.permute.xlu0 %1293
    %v1296 = vmul.f32 %v1288, %v1294
    %1298 = vrot.lane.b32.xlu0 %v1296, 32
    %v1299 = vpop.permute.xlu0 %1298
    %v1301 = vadd.f32 %v1291, %v1299
    %v1302 = vtanh.pop %v1301
    %1304 = vrot.lane.b32.xlu0 %v1302, 64
    %v1305 = vpop.permute.xlu0 %1304
    %v1307 = vmul.f32 %v1288, %v1305
    %v1308 = vpack.c.bf16 %v1307, %v1307
    %1310 = vrot.lane.b32.xlu0 %v1307, 32
    %v1311 = vpop.permute.xlu0 %1310
    %1313 = vst.msk [vmem:[#allocation2 + $0x18] sm:$0xff] %vm151, %v1311
    %1315 = vrot.lane.b32.xlu0 %v1308, 32
    %v1316 = vpop.permute.xlu0 %1315
    %v1318 = vsel %vm151, %v1316, 0
    %1320 = vmatprep.subr.bf16.mxu0 0
    %1321 = vmatpush1.bf16.msra.mxu0 %v997
    %1322 = vmatprep.subr.bf16.mxu0 0
    %1323 = vmatpush1.bf16.msra.mxu0 %v998
    %1324 = vmatprep.subr.bf16.mxu0 0
    %1325 = vmatpush1.bf16.msra.mxu0 0
    %1326 = vmatprep.subr.bf16.mxu0 0
    %1327 = vmatpush1.bf16.msra.mxu0 0
    %1328 = vmatprep.subr.bf16.mxu0 0
    %1329 = vmatpush1.bf16.msra.mxu0 0
    %1330 = vmatprep.subr.bf16.mxu0 0
    %1331 = vmatpush1.bf16.msra.mxu0 0
    %1332 = vmatprep.subr.bf16.mxu0 0
    %1333 = vmatpush1.bf16.msra.mxu0 0
    %1334 = vmatprep.subr.bf16.mxu0 0
    %1335 = vmatpush1.bf16.msra.mxu0 0
    %1336 = vmatprep.subr.bf16.mxu0 0
    %1337 = vmatpush1.bf16.msra.mxu0 0
    %1338 = vmatprep.subr.bf16.mxu0 0
    %1339 = vmatpush1.bf16.msra.mxu0 0
    %1340 = vmatprep.subr.bf16.mxu0 0
    %1341 = vmatpush1.bf16.msra.mxu0 0
    %1342 = vmatprep.subr.bf16.mxu0 0
    %1343 = vmatpush1.bf16.msra.mxu0 0
    %1344 = vmatprep.subr.bf16.mxu0 0
    %1345 = vmatpush1.bf16.msra.mxu0 0
    %1346 = vmatprep.subr.bf16.mxu0 0
    %1347 = vmatpush1.bf16.msra.mxu0 0
    %1348 = vmatprep.subr.bf16.mxu0 0
    %1349 = vmatpush1.bf16.msra.mxu0 0
    %1350 = vmatprep.subr.bf16.mxu0 0
    %1351 = vmatpush1.bf16.msra.mxu0 0
    %1352 = vmatprep.mubr.bf16.mxu0 0
    %1353 = vmatmul.mubr.bf16.gmra.mrb[0].mxu0 %v1318
    %v1354 = vpop.f32.mrb[0].mxu0
    %v1355 = vadd.f32 0.0, %v1354
    %v1356 = vpop.f32.mrb[0].mxu0
    %v1357 = vpop.f32.mrb[0].mxu0
    %v1358 = vpop.f32.mrb[0].mxu0
    %1359 = vdwg.mxu0
    %v1360 = vadd.f32 %v970, %v1355
    %v1361 = vxor.u32 %v1360, 2147483648
    %v1362 = vmul.f32 %v1361, 1.442695
    %v1363 = vpow.pop %v1362
    %v1364 = vadd.f32 %v1363, 1.0
    %v1365 = vrcp.pop %v1364
    %v1366 = vmul.f32 1.0, %v1365
    %v1367 = vmul.f32 %v1366, 2.0
    %v1368 = vsub.f32 %v1367, 1.0
    %v1369 = vmul.f32 %v1366, %v1301
    %1371 = vrot.lane.b32.xlu0 %v1368, 64
    %v1372 = vpop.permute.xlu0 %1371
    %v1374 = vmul.f32 %v1366, %v1372
    %1376 = vrot.lane.b32.xlu0 %v1374, 32
    %v1377 = vpop.permute.xlu0 %1376
    %v1379 = vadd.f32 %v1369, %v1377
    %v1380 = vtanh.pop %v1379
    %1382 = vrot.lane.b32.xlu0 %v1380, 64
    %v1383 = vpop.permute.xlu0 %1382
    %v1385 = vmul.f32 %v1366, %v1383
    %v1386 = vpack.c.bf16 %v1385, %v1385
    %1388 = vrot.lane.b32.xlu0 %v1385, 32
    %v1389 = vpop.permute.xlu0 %1388
    %1391 = vst.msk [vmem:[#allocation2 + $0x20] sm:$0xff] %vm151, %v1389
    %1393 = vrot.lane.b32.xlu0 %v1386, 32
    %v1394 = vpop.permute.xlu0 %1393
    %v1396 = vsel %vm151, %v1394, 0
    %1398 = vmatprep.subr.bf16.mxu0 0
    %1399 = vmatpush1.bf16.msra.mxu0 %v997
    %1400 = vmatprep.subr.bf16.mxu0 0
    %1401 = vmatpush1.bf16.msra.mxu0 %v998
    %1402 = vmatprep.subr.bf16.mxu0 0
    %1403 = vmatpush1.bf16.msra.mxu0 0
    %1404 = vmatprep.subr.bf16.mxu0 0
    %1405 = vmatpush1.bf16.msra.mxu0 0
    %1406 = vmatprep.subr.bf16.mxu0 0
    %1407 = vmatpush1.bf16.msra.mxu0 0
    %1408 = vmatprep.subr.bf16.mxu0 0
    %1409 = vmatpush1.bf16.msra.mxu0 0
    %1410 = vmatprep.subr.bf16.mxu0 0
    %1411 = vmatpush1.bf16.msra.mxu0 0
    %1412 = vmatprep.subr.bf16.mxu0 0
    %1413 = vmatpush1.bf16.msra.mxu0 0
    %1414 = vmatprep.subr.bf16.mxu0 0
    %1415 = vmatpush1.bf16.msra.mxu0 0
    %1416 = vmatprep.subr.bf16.mxu0 0
    %1417 = vmatpush1.bf16.msra.mxu0 0
    %1418 = vmatprep.subr.bf16.mxu0 0
    %1419 = vmatpush1.bf16.msra.mxu0 0
    %1420 = vmatprep.subr.bf16.mxu0 0
    %1421 = vmatpush1.bf16.msra.mxu0 0
    %1422 = vmatprep.subr.bf16.mxu0 0
    %1423 = vmatpush1.bf16.msra.mxu0 0
    %1424 = vmatprep.subr.bf16.mxu0 0
    %1425 = vmatpush1.bf16.msra.mxu0 0
    %1426 = vmatprep.subr.bf16.mxu0 0
    %1427 = vmatpush1.bf16.msra.mxu0 0
    %1428 = vmatprep.subr.bf16.mxu0 0
    %1429 = vmatpush1.bf16.msra.mxu0 0
    %1430 = vmatprep.mubr.bf16.mxu0 0
    %1431 = vmatmul.mubr.bf16.gmra.mrb[0].mxu0 %v1396
    %v1432 = vpop.f32.mrb[0].mxu0
    %v1433 = vadd.f32 0.0, %v1432
    %v1434 = vpop.f32.mrb[0].mxu0
    %v1435 = vpop.f32.mrb[0].mxu0
    %v1436 = vpop.f32.mrb[0].mxu0
    %1437 = vdwg.mxu0
    %v1438 = vadd.f32 %v973, %v1433
    %v1439 = vxor.u32 %v1438, 2147483648
    %v1440 = vmul.f32 %v1439, 1.442695
    %v1441 = vpow.pop %v1440
    %v1442 = vadd.f32 %v1441, 1.0
    %v1443 = vrcp.pop %v1442
    %v1444 = vmul.f32 1.0, %v1443
    %v1445 = vmul.f32 %v1444, 2.0
    %v1446 = vsub.f32 %v1445, 1.0
    %v1447 = vmul.f32 %v1444, %v1379
    %1449 = vrot.lane.b32.xlu0 %v1446, 64
    %v1450 = vpop.permute.xlu0 %1449
    %v1452 = vmul.f32 %v1444, %v1450
    %1454 = vrot.lane.b32.xlu0 %v1452, 32
    %v1455 = vpop.permute.xlu0 %1454
    %v1457 = vadd.f32 %v1447, %v1455
    %v1458 = vtanh.pop %v1457
    %1460 = vrot.lane.b32.xlu0 %v1458, 64
    %v1461 = vpop.permute.xlu0 %1460
    %v1463 = vmul.f32 %v1444, %v1461
    %v1464 = vpack.c.bf16 %v1463, %v1463
    %1466 = vrot.lane.b32.xlu0 %v1463, 32
    %v1467 = vpop.permute.xlu0 %1466
    %1469 = vst.msk [vmem:[#allocation2 + $0x28] sm:$0xff] %vm151, %v1467
    %1471 = vrot.lane.b32.xlu0 %v1464, 32
    %v1472 = vpop.permute.xlu0 %1471
    %v1474 = vsel %vm151, %v1472, 0
    %1476 = vmatprep.subr.bf16.mxu0 0
    %1477 = vmatpush1.bf16.msra.mxu0 %v997
    %1478 = vmatprep.subr.bf16.mxu0 0
    %1479 = vmatpush1.bf16.msra.mxu0 %v998
    %1480 = vmatprep.subr.bf16.mxu0 0
    %1481 = vmatpush1.bf16.msra.mxu0 0
    %1482 = vmatprep.subr.bf16.mxu0 0
    %1483 = vmatpush1.bf16.msra.mxu0 0
    %1484 = vmatprep.subr.bf16.mxu0 0
    %1485 = vmatpush1.bf16.msra.mxu0 0
    %1486 = vmatprep.subr.bf16.mxu0 0
    %1487 = vmatpush1.bf16.msra.mxu0 0
    %1488 = vmatprep.subr.bf16.mxu0 0
    %1489 = vmatpush1.bf16.msra.mxu0 0
    %1490 = vmatprep.subr.bf16.mxu0 0
    %1491 = vmatpush1.bf16.msra.mxu0 0
    %1492 = vmatprep.subr.bf16.mxu0 0
    %1493 = vmatpush1.bf16.msra.mxu0 0
    %1494 = vmatprep.subr.bf16.mxu0 0
    %1495 = vmatpush1.bf16.msra.mxu0 0
    %1496 = vmatprep.subr.bf16.mxu0 0
    %1497 = vmatpush1.bf16.msra.mxu0 0
    %1498 = vmatprep.subr.bf16.mxu0 0
    %1499 = vmatpush1.bf16.msra.mxu0 0
    %1500 = vmatprep.subr.bf16.mxu0 0
    %1501 = vmatpush1.bf16.msra.mxu0 0
    %1502 = vmatprep.subr.bf16.mxu0 0
    %1503 = vmatpush1.bf16.msra.mxu0 0
    %1504 = vmatprep.subr.bf16.mxu0 0
    %1505 = vmatpush1.bf16.msra.mxu0 0
    %1506 = vmatprep.subr.bf16.mxu0 0
    %1507 = vmatpush1.bf16.msra.mxu0 0
    %1508 = vmatprep.mubr.bf16.mxu0 0
    %1509 = vmatmul.mubr.bf16.gmra.mrb[0].mxu0 %v1474
    %v1510 = vpop.f32.mrb[0].mxu0
    %v1511 = vadd.f32 0.0, %v1510
    %v1512 = vpop.f32.mrb[0].mxu0
    %v1513 = vpop.f32.mrb[0].mxu0
    %v1514 = vpop.f32.mrb[0].mxu0
    %1515 = vdwg.mxu0
    %v1516 = vadd.f32 %v978, %v1511
    %v1517 = vxor.u32 %v1516, 2147483648
    %v1518 = vmul.f32 %v1517, 1.442695
    %v1519 = vpow.pop %v1518
    %v1520 = vadd.f32 %v1519, 1.0
    %v1521 = vrcp.pop %v1520
    %v1522 = vmul.f32 1.0, %v1521
    %v1523 = vmul.f32 %v1522, 2.0
    %v1524 = vsub.f32 %v1523, 1.0
    %v1525 = vmul.f32 %v1522, %v1457
    %1527 = vrot.lane.b32.xlu0 %v1524, 64
    %v1528 = vpop.permute.xlu0 %1527
    %v1530 = vmul.f32 %v1522, %v1528
    %1532 = vrot.lane.b32.xlu0 %v1530, 32
    %v1533 = vpop.permute.xlu0 %1532
    %v1535 = vadd.f32 %v1525, %v1533
    %v1536 = vtanh.pop %v1535
    %1538 = vrot.lane.b32.xlu0 %v1536, 64
    %v1539 = vpop.permute.xlu0 %1538
    %v1541 = vmul.f32 %v1522, %v1539
    %v1542 = vpack.c.bf16 %v1541, %v1541
    %1544 = vrot.lane.b32.xlu0 %v1541, 32
    %v1545 = vpop.permute.xlu0 %1544
    %1547 = vst.msk [vmem:[#allocation2 + $0x30] sm:$0xff] %vm151, %v1545
    %1549 = vrot.lane.b32.xlu0 %v1542, 32
    %v1550 = vpop.permute.xlu0 %1549
    %v1552 = vsel %vm151, %v1550, 0
    %1554 = vmatprep.subr.bf16.mxu0 0
    %1555 = vmatpush1.bf16.msra.mxu0 %v997
    %1556 = vmatprep.subr.bf16.mxu0 0
    %1557 = vmatpush1.bf16.msra.mxu0 %v998
    %1558 = vmatprep.subr.bf16.mxu0 0
    %1559 = vmatpush1.bf16.msra.mxu0 0
    %1560 = vmatprep.subr.bf16.mxu0 0
    %1561 = vmatpush1.bf16.msra.mxu0 0
    %1562 = vmatprep.subr.bf16.mxu0 0
    %1563 = vmatpush1.bf16.msra.mxu0 0
    %1564 = vmatprep.subr.bf16.mxu0 0
    %1565 = vmatpush1.bf16.msra.mxu0 0
    %1566 = vmatprep.subr.bf16.mxu0 0
    %1567 = vmatpush1.bf16.msra.mxu0 0
    %1568 = vmatprep.subr.bf16.mxu0 0
    %1569 = vmatpush1.bf16.msra.mxu0 0
    %1570 = vmatprep.subr.bf16.mxu0 0
    %1571 = vmatpush1.bf16.msra.mxu0 0
    %1572 = vmatprep.subr.bf16.mxu0 0
    %1573 = vmatpush1.bf16.msra.mxu0 0
    %1574 = vmatprep.subr.bf16.mxu0 0
    %1575 = vmatpush1.bf16.msra.mxu0 0
    %1576 = vmatprep.subr.bf16.mxu0 0
    %1577 = vmatpush1.bf16.msra.mxu0 0
    %1578 = vmatprep.subr.bf16.mxu0 0
    %1579 = vmatpush1.bf16.msra.mxu0 0
    %1580 = vmatprep.subr.bf16.mxu0 0
    %1581 = vmatpush1.bf16.msra.mxu0 0
    %1582 = vmatprep.subr.bf16.mxu0 0
    %1583 = vmatpush1.bf16.msra.mxu0 0
    %1584 = vmatprep.subr.bf16.mxu0 0
    %1585 = vmatpush1.bf16.msra.mxu0 0
    %1586 = vmatprep.mubr.bf16.mxu0 0
    %1587 = vmatmul.mubr.bf16.gmra.mrb[0].mxu0 %v1552
    %v1588 = vpop.f32.mrb[0].mxu0
    %v1589 = vadd.f32 0.0, %v1588
    %v1590 = vpop.f32.mrb[0].mxu0
    %v1591 = vpop.f32.mrb[0].mxu0
    %v1592 = vpop.f32.mrb[0].mxu0
    %1593 = vdwg.mxu0
    %v1594 = vadd.f32 %v981, %v1589
    %v1595 = vxor.u32 %v1594, 2147483648
    %v1596 = vmul.f32 %v1595, 1.442695
    %v1597 = vpow.pop %v1596
    %v1598 = vadd.f32 %v1597, 1.0
    %v1599 = vrcp.pop %v1598
    %v1600 = vmul.f32 1.0, %v1599
    %v1601 = vmul.f32 %v1600, 2.0
    %v1602 = vsub.f32 %v1601, 1.0
    %v1603 = vmul.f32 %v1600, %v1535
    %1605 = vrot.lane.b32.xlu0 %v1602, 64
    %v1606 = vpop.permute.xlu0 %1605
    %v1608 = vmul.f32 %v1600, %v1606
    %1610 = vrot.lane.b32.xlu0 %v1608, 32
    %v1611 = vpop.permute.xlu0 %1610
    %v1613 = vadd.f32 %v1603, %v1611
    %v1614 = vtanh.pop %v1613
    %1616 = vrot.lane.b32.xlu0 %v1614, 64
    %v1617 = vpop.permute.xlu0 %1616
    %v1619 = vmul.f32 %v1600, %v1617
    %1621 = vrot.lane.b32.xlu0 %v1619, 32
    %v1622 = vpop.permute.xlu0 %1621
    %1624 = vst.msk [vmem:[#allocation2 + $0x38] sm:$0xff] %vm151, %v1622
    %v1625 = vld [vmem:[#allocation2] sm:$0xff]
    %v1626 = vld [vmem:[#allocation2 + $0x8] sm:$0xff]
    %v1627 = vld [vmem:[#allocation2 + $0x10] sm:$0xff]
    %v1628 = vld [vmem:[#allocation2 + $0x18] sm:$0xff]
    %v1629 = vld [vmem:[#allocation2 + $0x20] sm:$0xff]
    %v1630 = vld [vmem:[#allocation2 + $0x28] sm:$0xff]
    %v1631 = vld [vmem:[#allocation2 + $0x30] sm:$0xff]
    %v1632 = vld [vmem:[#allocation2 + $0x38] sm:$0xff]
    %v1633 = vpack.c.bf16 %v1626, %v1625
    %v1634 = vpack.c.bf16 %v1628, %v1627
    %v1635 = vpack.c.bf16 %v1630, %v1629
    %v1636 = vpack.c.bf16 %v1632, %v1631
    %v1637 = vld [vmem:[%s7] sm:$0xf]
    %v1638 = vld [vmem:[%s7 + $0x4] sm:$0xf]
    %v1639 = vld [vmem:[%s7 + $0x8] sm:$0xf]
    %v1640 = vld [vmem:[%s7 + $0xc] sm:$0xf]
    %v1641 = vld [vmem:[%s8] sm:$0x1]
    %v1643 = vlaneseq
    %v1644 = vshrl.u32 %v1643, 7
    %v1645 = vsub.s32 0, %v1644
    %v1646 = vrot.slane %v1641, %v1645
    %v1652 = vunpack.c.l.b16 %v1637
    %v1653 = vunpack.c.l.b16 %v1638
    %v1654 = vunpack.c.l.b16 %v1639
    %v1655 = vunpack.c.l.b16 %v1640
    %v1656 = vpack.c.b16 %v1653, %v1652
    %v1657 = vpack.c.b16 %v1655, %v1654
    %v1661 = vsel %vm151, %v1633, 0
    %v1664 = vsel %vm151, %v1634, 0
    %v1667 = vsel %vm151, %v1635, 0
    %v1670 = vsel %vm151, %v1636, 0
    %1672 = vmatprep.subr.bf16.mxu0 0
    %1673 = vmatpush1.bf16.msra.mxu0 %v1656
    %1674 = vmatprep.subr.bf16.mxu0 0
    %1675 = vmatpush1.bf16.msra.mxu0 %v1657
    %1676 = vmatprep.subr.bf16.mxu0 0
    %1677 = vmatpush1.bf16.msra.mxu0 0
    %1678 = vmatprep.subr.bf16.mxu0 0
    %1679 = vmatpush1.bf16.msra.mxu0 0
    %1680 = vmatprep.subr.bf16.mxu0 0
    %1681 = vmatpush1.bf16.msra.mxu0 0
    %1682 = vmatprep.subr.bf16.mxu0 0
    %1683 = vmatpush1.bf16.msra.mxu0 0
    %1684 = vmatprep.subr.bf16.mxu0 0
    %1685 = vmatpush1.bf16.msra.mxu0 0
    %1686 = vmatprep.subr.bf16.mxu0 0
    %1687 = vmatpush1.bf16.msra.mxu0 0
    %1688 = vmatprep.subr.bf16.mxu0 0
    %1689 = vmatpush1.bf16.msra.mxu0 0
    %1690 = vmatprep.subr.bf16.mxu0 0
    %1691 = vmatpush1.bf16.msra.mxu0 0
    %1692 = vmatprep.subr.bf16.mxu0 0
    %1693 = vmatpush1.bf16.msra.mxu0 0
    %1694 = vmatprep.subr.bf16.mxu0 0
    %1695 = vmatpush1.bf16.msra.mxu0 0
    %1696 = vmatprep.subr.bf16.mxu0 0
    %1697 = vmatpush1.bf16.msra.mxu0 0
    %1698 = vmatprep.subr.bf16.mxu0 0
    %1699 = vmatpush1.bf16.msra.mxu0 0
    %1700 = vmatprep.subr.bf16.mxu0 0
    %1701 = vmatpush1.bf16.msra.mxu0 0
    %1702 = vmatprep.subr.bf16.mxu0 0
    %1703 = vmatpush1.bf16.msra.mxu0 0
    %1704 = vmatprep.mubr.bf16.mxu0 0
    %1705 = vmatmul.mubr.bf16.gmra.mrb[0].mxu0 %v1661
    %v1706 = vpop.f32.mrb[0].mxu0
    %v1707 = vadd.f32 %v1646, %v1706
    %v1708 = vpop.f32.mrb[0].mxu0
    %v1709 = vpop.f32.mrb[0].mxu0
    %v1710 = vadd.f32 %v1646, %v1709
    %v1711 = vpop.f32.mrb[0].mxu0
    %1712 = vmatprep.mubr.bf16.mxu0 0
    %1713 = vmatmul.mubr.bf16.gmra.mrb[0].mxu0 %v1664
    %v1714 = vpop.f32.mrb[0].mxu0
    %v1715 = vadd.f32 %v1646, %v1714
    %v1716 = vpop.f32.mrb[0].mxu0
    %v1717 = vpop.f32.mrb[0].mxu0
    %v1718 = vadd.f32 %v1646, %v1717
    %v1719 = vpop.f32.mrb[0].mxu0
    %1720 = vmatprep.mubr.bf16.mxu0 0
    %1721 = vmatmul.mubr.bf16.gmra.mrb[0].mxu0 %v1667
    %v1722 = vpop.f32.mrb[0].mxu0
    %v1723 = vadd.f32 %v1646, %v1722
    %v1724 = vpop.f32.mrb[0].mxu0
    %v1725 = vpop.f32.mrb[0].mxu0
    %v1726 = vadd.f32 %v1646, %v1725
    %v1727 = vpop.f32.mrb[0].mxu0
    %1728 = vmatprep.mubr.bf16.mxu0 0
    %1729 = vmatmul.mubr.bf16.gmra.mrb[0].mxu0 %v1670
    %v1730 = vpop.f32.mrb[0].mxu0
    %v1731 = vadd.f32 %v1646, %v1730
    %v1732 = vpop.f32.mrb[0].mxu0
    %v1733 = vpop.f32.mrb[0].mxu0
    %v1734 = vadd.f32 %v1646, %v1733
    %v1735 = vpop.f32.mrb[0].mxu0
    %1736 = vdwg.mxu0
    %1737 = vst [vmem:[#allocation8] sm:$0xff] %v1707
    %1738 = vst [vmem:[#allocation8 + $0x8] sm:$0xff] %v1710
    %1739 = vst [vmem:[#allocation8 + $0x10] sm:$0xff] %v1715
    %1740 = vst [vmem:[#allocation8 + $0x18] sm:$0xff] %v1718
    %1741 = vst [vmem:[#allocation8 + $0x20] sm:$0xff] %v1723
    %1742 = vst [vmem:[#allocation8 + $0x28] sm:$0xff] %v1726
    %1743 = vst [vmem:[#allocation8 + $0x30] sm:$0xff] %v1731
    %1744 = vst [vmem:[#allocation8 + $0x38] sm:$0xff] %v1734
    %1745 = vst.msk [vmem:[#allocation9] sm:$0xff] %vm151, %v865
    %1746 = vst.msk [vmem:[#allocation9 + $0x8] sm:$0xff] %vm151, %v1622
    %1749 = vrot.lane.b32.xlu0 %v856, 96
    %v1750 = vpop.permute.xlu0 %1749
    %1751 = vrot.lane.b32.xlu0 %v1613, 96
    %v1752 = vpop.permute.xlu0 %1751
    %1755 = vst.msk [vmem:[#allocation11] sm:$0xff] %vm151, %v1750
    %1756 = vst.msk [vmem:[#allocation11 + $0x8] sm:$0xff] %vm151, %v1752
    // Predicated region
    $region54: #{tpu_custom_call.1} parent=1 // pred_check
      _
    $region55: #{tpu_custom_call.1} parent=1 // pred_check_branch
      %1758 = sbr.rel (0) target = $region57
    $region56: #{tpu_custom_call.1} parent=1 // pred_region
      %s1760 = ssub.s32 1024, 1024
      %1761 = vsyncadd [#allocation5], %s1760
      %s1762 = sshll.u32 [#allocation8], 4
      %s1763 = int_to_ptr.vmem [resolvable:$true] %s1762
      %1768 = dma.vmem_to_hbm [thread:$0]  %s1763, 1024, %s11, [#allocation5], 128, 128, 8
    $region57: #{tpu_custom_call.1} parent=1 // pred_fallthru
      _
    // Predicated region
    $region58: #{tpu_custom_call.1} parent=1 // pred_check
      _
    $region59: #{tpu_custom_call.1} parent=1 // pred_check_branch
      %1770 = sbr.rel (0) target = $region61
    $region60: #{tpu_custom_call.1} parent=1 // pred_region
      %s1772 = ssub.s32 256, 256
      %1773 = vsyncadd [#allocation10], %s1772
      %s1774 = sshll.u32 [#allocation9], 4
      %s1775 = int_to_ptr.vmem [resolvable:$true] %s1774
      %1780 = dma.vmem_to_hbm [thread:$0]  %s1775, 256, %s12, [#allocation10], 128, 128, 8
    $region61: #{tpu_custom_call.1} parent=1 // pred_fallthru
      _
    // Predicated region
    $region62: #{tpu_custom_call.1} parent=1 // pred_check
      _
    $region63: #{tpu_custom_call.1} parent=1 // pred_check_branch
      %1782 = sbr.rel (0) target = $region65
    $region64: #{tpu_custom_call.1} parent=1 // pred_region
      %s1784 = ssub.s32 256, 256
      %1785 = vsyncadd [#allocation10], %s1784
      %s1786 = sshll.u32 [#allocation11], 4
      %s1787 = int_to_ptr.vmem [resolvable:$true] %s1786
      %1792 = dma.vmem_to_hbm [thread:$0]  %s1787, 256, %s13, [#allocation10], 128, 128, 8
    $region65: #{tpu_custom_call.1} parent=1 // pred_fallthru
      _
    // Predicated region
    $region66: #{tpu_custom_call.1} parent=1 // pred_check
      _
    $region67: #{tpu_custom_call.1} parent=1 // pred_check_branch
      %1794 = sbr.rel (0) target = $region69
    $region68: #{tpu_custom_call.1} parent=1 // pred_region
      %1795 = dma.done [#allocation5], 1024
    $region69: #{tpu_custom_call.1} parent=1 // pred_fallthru
      _
    // Predicated region
    $region70: #{tpu_custom_call.1} parent=1 // pred_check
      _
    $region71: #{tpu_custom_call.1} parent=1 // pred_check_branch
      %1797 = sbr.rel (0) target = $region73
    $region72: #{tpu_custom_call.1} parent=1 // pred_region
      %1798 = dma.done [#allocation10], 256
    $region73: #{tpu_custom_call.1} parent=1 // pred_fallthru
      _
    // Predicated region
    $region74: #{tpu_custom_call.1} parent=1 // pred_check
      _
    $region75: #{tpu_custom_call.1} parent=1 // pred_check_branch
      %1800 = sbr.rel (0) target = $region77
    $region76: #{tpu_custom_call.1} parent=1 // pred_region
      %1801 = dma.done [#allocation10], 256
    $region77: #{tpu_custom_call.1} parent=1 // pred_fallthru
      _
    %1802 = vsyncpa [#allocation4], 1
    %1803 = vsyncpa [#allocation7], 1
    %1804 = vsyncpa [#allocation5], 1
    %1805 = vsyncpa [#allocation10], 1

</llo_original>
